<compile_context>
chip_gen: v7x
topology: tpu7x:2x2x1
jax: 0.10.0
libtpu: 0.0.40
codegen_flags: <defaults>
</compile_context>

<pallas_src>
import jax
import jax.numpy as jnp
import numpy as np
from jax.experimental import pallas as pl
from jax.experimental.pallas import tpu as pltpu


def _preprocess_kernel(x_ref, flip_ref, norm_ref, perm_ref, mean_ref, inv_std_ref, o_ref):
    """One grid step = TB samples, lane-dense layout.

    x_ref       : VMEM (TB, D)   flattened samples, D = C*H*W
    flip_ref    : VMEM (TB, 1)   float {0,1} per-sample flip gate
    norm_ref    : VMEM (TB, 1)   float {0,1} per-sample normalize gate
    perm_ref    : VMEM (D, D)    block-diagonal W-reversal permutation matrix
    mean_ref    : VMEM (1, D)    per-channel mean broadcast over H*W
    inv_std_ref : VMEM (1, D)    per-channel 1/std broadcast over H*W
    o_ref       : VMEM (TB, D)
    """
    x = x_ref[...].astype(jnp.float32)                                  # (TB, D)

    # Horizontal flip (reverse within each contiguous W segment) as a single
    # lane-dense MXU matmul with an exact 0/1 permutation matrix.
    xf = jnp.dot(x, perm_ref[...], preferred_element_type=jnp.float32)  # (TB, D)

    fm = flip_ref[...] > 0.0                                            # (TB, 1) bool
    nm = norm_ref[...] > 0.0                                            # (TB, 1) bool

    y = jnp.where(fm, xf, x)                                            # broadcast select (VPU)
    y = jnp.where(nm, (y - mean_ref[...]) * inv_std_ref[...], y)

    o_ref[...] = y.astype(o_ref.dtype)


def image_preprocessing(x, flip_flags, norm_flags, mean, std, *, tb=512):
    """x: float32[N, C, H, W]; flip_flags/norm_flags: int32[N]; mean/std: float32[C]."""
    N, C, H, W = x.shape
    D = C * H * W

    # Batch tile: one grid step handles TB samples.  When N <= tb we take the
    # whole batch in one step (block == full array, always layout-legal);
    # otherwise TB must be a multiple of 8 for the sublane constraint.
    if N <= tb:
        TB = N
    else:
        TB = tb
        assert TB % 8 == 0, "batch tile must be a multiple of 8"
    num_tiles = -(-N // TB)
    N_pad = num_tiles * TB

    # Lane-dense flattening + float mask columns; pad batch to a tile multiple.
    x_flat = x.reshape(N, D)
    flip_m = flip_flags.astype(jnp.float32).reshape(N, 1)
    norm_m = norm_flags.astype(jnp.float32).reshape(N, 1)
    if N_pad != N:
        pad = N_pad - N
        x_flat = jnp.pad(x_flat, ((0, pad), (0, 0)))
        flip_m = jnp.pad(flip_m, ((0, pad), (0, 0)))
        norm_m = jnp.pad(norm_m, ((0, pad), (0, 0)))

    # Block-diagonal permutation: C*H diagonal blocks, each a WxW anti-identity.
    # (x_flat @ perm)[:, b*W + j] == x_flat[:, b*W + (W-1-j)]  -> hflip per (c,h) row.
    rev = jnp.flip(jnp.eye(W, dtype=jnp.float32), axis=1)
    perm = jnp.kron(jnp.eye(C * H, dtype=jnp.float32), rev)              # (D, D)

    # Fold per-channel mean / 1/std into lane-dense (1, D) rows.
    mean_row = jnp.repeat(mean.astype(jnp.float32), H * W).reshape(1, D)
    inv_std_row = jnp.repeat((1.0 / std.astype(jnp.float32)), H * W).reshape(1, D)

    grid_spec = pltpu.PrefetchScalarGridSpec(
        num_scalar_prefetch=0,
        grid=(num_tiles,),
        in_specs=[
            pl.BlockSpec((TB, D), lambda i: (i, 0)),   # x
            pl.BlockSpec((TB, 1), lambda i: (i, 0)),   # flip mask
            pl.BlockSpec((TB, 1), lambda i: (i, 0)),   # norm mask
            pl.BlockSpec((D, D), lambda i: (0, 0)),    # permutation (resident)
            pl.BlockSpec((1, D), lambda i: (0, 0)),    # mean row (resident)
            pl.BlockSpec((1, D), lambda i: (0, 0)),    # inv_std row (resident)
        ],
        out_specs=pl.BlockSpec((TB, D), lambda i: (i, 0)),
    )

    out_flat = pl.pallas_call(
        _preprocess_kernel,
        out_shape=jax.ShapeDtypeStruct((N_pad, D), x.dtype),
        grid_spec=grid_spec,
        compiler_params=pltpu.CompilerParams(
            dimension_semantics=("parallel",),        # batch axis independent (v7x: 2 TCs)
        ),
    )(x_flat, flip_m, norm_m, perm, mean_row, inv_std_row)

    return out_flat[:N].reshape(N, C, H, W)


def _reference(x, flip_flags, norm_flags, mean, std):
    """Plain-JAX reference of the same per-sample semantics."""
    mean4 = mean.reshape(1, -1, 1, 1)
    std4 = std.reshape(1, -1, 1, 1)
    flipped = jnp.flip(x, axis=-1)
    f = (flip_flags > 0).reshape(-1, 1, 1, 1)
    n = (norm_flags > 0).reshape(-1, 1, 1, 1)
    y = jnp.where(f, flipped, x)
    y = jnp.where(n, (y - mean4) / std4, y)
    return y


def _make_flags(key, n):
    """Emulate __processing_one_sample: prob = rand(n) gating draws per sample,
    plus RandomHorizontalFlip's internal coin (p = 0.5)."""
    kgate, kcoin = jax.random.split(key)
    list_probs = jnp.array([1.0, 1.0], dtype=jnp.float32)  # CIFAR100 config: both prob=1
    gate = jax.random.uniform(kgate, (n, 2), dtype=jnp.float32)
    coin = jax.random.uniform(kcoin, (n,), dtype=jnp.float32)
    flip = jnp.logical_and(gate[:, 0] <= list_probs[0], coin < 0.5).astype(jnp.int32)
    norm = (gate[:, 1] <= list_probs[1]).astype(jnp.int32)
    return flip, norm


if __name__ == "__main__":
    key = jax.random.PRNGKey(0)
    mean = jnp.array([0.5, 0.5, 0.5], dtype=jnp.float32)
    std = jnp.array([0.5, 0.5, 0.5], dtype=jnp.float32)

    # --- small demo: x = [num_sam, num_channel, high, width] ---
    N, C, H, W = 2, 3, 16, 16
    kx, kflag, key = jax.random.split(key, 3)
    x = jax.random.uniform(kx, (N, C, H, W), dtype=jnp.float32)
    flip_flags, norm_flags = _make_flags(kflag, N)

    out = jax.block_until_ready(image_preprocessing(x, flip_flags, norm_flags, mean, std))
    ref = jax.block_until_ready(_reference(x, flip_flags, norm_flags, mean, std))
    np.testing.assert_allclose(np.asarray(out), np.asarray(ref), rtol=1e-5, atol=1e-5)

    # --- batch-tiled path (multiple grid steps + padding) ---
    N2 = 20
    kx2, kflag2, key = jax.random.split(key, 3)
    x2 = jax.random.uniform(kx2, (N2, C, H, W), dtype=jnp.float32)
    flip2, norm2 = _make_flags(kflag2, N2)

    out2 = jax.block_until_ready(image_preprocessing(x2, flip2, norm2, mean, std, tb=8))
    ref2 = jax.block_until_ready(_reference(x2, flip2, norm2, mean, std))
    np.testing.assert_allclose(np.asarray(out2), np.asarray(ref2), rtol=1e-5, atol=1e-5)

    print("KERNEL_OK")
</pallas_src>

<mosaic_0001>
module attributes {stable_mosaic.version = 11 : i64} {
  func.func @_preprocess_kernel(%arg0: i32, %arg1: memref<2x768xf32, #tpu.memory_space<vmem>>, %arg2: memref<2x1xf32, #tpu.memory_space<vmem>>, %arg3: memref<2x1xf32, #tpu.memory_space<vmem>>, %arg4: memref<768x768xf32, #tpu.memory_space<vmem>>, %arg5: memref<1x768xf32, #tpu.memory_space<vmem>>, %arg6: memref<1x768xf32, #tpu.memory_space<vmem>>, %arg7: memref<2x768xf32, #tpu.memory_space<vmem>>) attributes {dimension_semantics = [#tpu.dimension_semantics<parallel>], iteration_bounds = array<i64: 1>, scalar_prefetch = 0 : i64, scratch_operands = 0 : i64, tpu.core_type = #tpu.core_type<tc>, window_params = [{transform_indices = @transform_0, window_bounds = array<i64: 2, 768>}, {transform_indices = @transform_1, window_bounds = array<i64: 2, 1>}, {transform_indices = @transform_2, window_bounds = array<i64: 2, 1>}, {pipeline_mode = #tpu.pipeline_mode<synchronous>, transform_indices = @transform_3, window_bounds = array<i64: 768, 768>}, {pipeline_mode = #tpu.pipeline_mode<synchronous>, transform_indices = @transform_4, window_bounds = array<i64: 1, 768>}, {pipeline_mode = #tpu.pipeline_mode<synchronous>, transform_indices = @transform_5, window_bounds = array<i64: 1, 768>}, {transform_indices = @transform_6, window_bounds = array<i64: 2, 768>}]} {
    %c0 = arith.constant 0 : index
    %c0_0 = arith.constant 0 : index
    %0 = vector.load %arg1[%c0, %c0_0] : memref<2x768xf32, #tpu.memory_space<vmem>>, vector<2x768xf32>
    %c0_1 = arith.constant 0 : index
    %c0_2 = arith.constant 0 : index
    %1 = vector.load %arg4[%c0_1, %c0_2] : memref<768x768xf32, #tpu.memory_space<vmem>>, vector<768x768xf32>
    %cst = arith.constant dense<0.000000e+00> : vector<2x768xf32>
    %2 = tpu.matmul %0, %1, %cst {dimension_numbers = #tpu.dot_dimension_numbers<[1], [0], [0], [1], [0, 0, 1, 1], [], []>} : vector<2x768xf32>, vector<768x768xf32>, vector<2x768xf32> -> vector<2x768xf32>
    %c0_3 = arith.constant 0 : index
    %c0_4 = arith.constant 0 : index
    %3 = vector.load %arg2[%c0_3, %c0_4] : memref<2x1xf32, #tpu.memory_space<vmem>>, vector<2x1xf32>
    %cst_5 = arith.constant 0.000000e+00 : f32
    %4 = vector.broadcast %cst_5 : f32 to vector<2x1xf32>
    %5 = arith.cmpf ogt, %3, %4 : vector<2x1xf32>
    %c0_6 = arith.constant 0 : index
    %c0_7 = arith.constant 0 : index
    %6 = vector.load %arg3[%c0_6, %c0_7] : memref<2x1xf32, #tpu.memory_space<vmem>>, vector<2x1xf32>
    %cst_8 = arith.constant 0.000000e+00 : f32
    %7 = vector.broadcast %cst_8 : f32 to vector<2x1xf32>
    %8 = arith.cmpf ogt, %6, %7 : vector<2x1xf32>
    %9 = vector.shape_cast %5 : vector<2x1xi1> to vector<2x1xi1>
    %10 = vector.broadcast %9 : vector<2x1xi1> to vector<2x768xi1>
    %11 = arith.select %10, %2, %0 : vector<2x768xi1>, vector<2x768xf32>
    %c0_9 = arith.constant 0 : index
    %c0_10 = arith.constant 0 : index
    %12 = vector.load %arg5[%c0_9, %c0_10] : memref<1x768xf32, #tpu.memory_space<vmem>>, vector<1x768xf32>
    %13 = vector.broadcast %12 : vector<1x768xf32> to vector<2x768xf32>
    %14 = arith.subf %11, %13 : vector<2x768xf32>
    %c0_11 = arith.constant 0 : index
    %c0_12 = arith.constant 0 : index
    %15 = vector.load %arg6[%c0_11, %c0_12] : memref<1x768xf32, #tpu.memory_space<vmem>>, vector<1x768xf32>
    %16 = vector.broadcast %15 : vector<1x768xf32> to vector<2x768xf32>
    %17 = arith.mulf %14, %16 : vector<2x768xf32>
    %18 = vector.shape_cast %8 : vector<2x1xi1> to vector<2x1xi1>
    %19 = vector.broadcast %18 : vector<2x1xi1> to vector<2x768xi1>
    %20 = arith.select %19, %17, %11 : vector<2x768xi1>, vector<2x768xf32>
    %c0_13 = arith.constant 0 : index
    %c0_14 = arith.constant 0 : index
    %21 = vector.load %arg7[%c0_13, %c0_14] : memref<2x768xf32, #tpu.memory_space<vmem>>, vector<2x768xf32>
    tpu.vector_store %arg7[%c0_13, %c0_14], %20 {strides = array<i32>} : memref<2x768xf32, #tpu.memory_space<vmem>>, vector<2x768xf32>,
    return
  }
  func.func @transform_0(%arg0: i32) -> (i32, i32) {
    %c0_i32 = arith.constant 0 : i32
    %c0_i32_0 = arith.constant 0 : i32
    return %arg0, %c0_i32 : i32, i32
  }
  func.func @transform_1(%arg0: i32) -> (i32, i32) {
    %c0_i32 = arith.constant 0 : i32
    %c0_i32_0 = arith.constant 0 : i32
    return %arg0, %c0_i32 : i32, i32
  }
  func.func @transform_2(%arg0: i32) -> (i32, i32) {
    %c0_i32 = arith.constant 0 : i32
    %c0_i32_0 = arith.constant 0 : i32
    return %arg0, %c0_i32 : i32, i32
  }
  func.func @transform_3(%arg0: i32) -> (i32, i32) {
    %c0_i32 = arith.constant 0 : i32
    %c0_i32_0 = arith.constant 0 : i32
    %c0_i32_1 = arith.constant 0 : i32
    return %c0_i32, %c0_i32_0 : i32, i32
  }
  func.func @transform_4(%arg0: i32) -> (i32, i32) {
    %c0_i32 = arith.constant 0 : i32
    %c0_i32_0 = arith.constant 0 : i32
    %c0_i32_1 = arith.constant 0 : i32
    return %c0_i32, %c0_i32_0 : i32, i32
  }
  func.func @transform_5(%arg0: i32) -> (i32, i32) {
    %c0_i32 = arith.constant 0 : i32
    %c0_i32_0 = arith.constant 0 : i32
    %c0_i32_1 = arith.constant 0 : i32
    return %c0_i32, %c0_i32_0 : i32, i32
  }
  func.func @transform_6(%arg0: i32) -> (i32, i32) {
    %c0_i32 = arith.constant 0 : i32
    %c0_i32_0 = arith.constant 0 : i32
    return %arg0, %c0_i32 : i32, i32
  }
}

</mosaic_0001>

<llo_original>
// kernel: tpu_custom_call.1
$region0: #{tpu_custom_call.1}
  #allocation0 [shape = 'u32[]', space=smem, size = 0x4, offset = 0x4, fixed_abs, tag = 'smem constant byte address 0x4 - core index']
  #allocation1 [shape = 'u32[144,128]{1,0:T(1,128)}', space=vmem, size = 0x12000, scoped, tag = 'internal scratch']
  %s0 = inlined_call_operand.hbm [shape: f32[2,768], index: 0, kind: input, shape index: {}]
  %s1 = inlined_call_operand.vmem [shape: f32[2,1], index: 1, kind: input, shape index: {}]
  %s2 = inlined_call_operand.vmem [shape: f32[2,1], index: 2, kind: input, shape index: {}]
  %s3 = inlined_call_operand.hbm [shape: f32[768,768], index: 3, kind: input, shape index: {}]
  %s4 = inlined_call_operand.hbm [shape: f32[1,768], index: 4, kind: input, shape index: {}]
  %s5 = inlined_call_operand.hbm [shape: f32[1,768], index: 5, kind: input, shape index: {}]
  %s6 = inlined_call_operand.hbm [shape: f32[2,768], index: 6, kind: output, shape index: {}]
  %s7 = sld [smem:[#allocation0]]
  $region50: #{tpu_custom_call.1} parent=0
    _
  %s9 = ssub.s32 1, %s7
  %s10 = scalar_select 0, %s9, %s7
  $region1: #{tpu_custom_call.1} parent=0
    #allocation2 [shape = 'u8[6144]{0}', space=vmem, size = 0x1800, scoped, tag = 'input window, operand 0, single buffered']
    #allocation3 [shape = 's32[1]{0}', space=sflag, size = 0x4, scoped, tag = 'scoped memory for tpu_custom_call.1']
    #allocation4 [shape = 's32[1]{0}', space=sflag, size = 0x4, scoped, tag = 'scoped memory for tpu_custom_call.1']
    #allocation5 [shape = 'u8[2359296]{0}', space=vmem, size = 0x240000, scoped, tag = 'input window, operand 3, single buffered']
    #allocation6 [shape = 's32[1]{0}', space=sflag, size = 0x4, scoped, tag = 'scoped memory for tpu_custom_call.1']
    #allocation7 [shape = 'u8[3072]{0}', space=vmem, size = 0xc00, scoped, tag = 'input window, operand 4, single buffered']
    #allocation8 [shape = 'u8[3072]{0}', space=vmem, size = 0xc00, scoped, tag = 'input window, operand 5, single buffered']
    #allocation9 [shape = 's32[1]{0}', space=sflag, size = 0x4, scoped, tag = 'scoped memory for tpu_custom_call.1']
    #allocation10 [shape = 'u8[6144]{0}', space=vmem, size = 0x1800, scoped, tag = 'output window, operand 0, single buffered']
    %11 = vsyncpa [#allocation3], 0
    %12 = vsyncpa [#allocation6], 0
    %13 = vsyncpa [#allocation9], 0
    %14 = vsyncpa [#allocation4], 0
    // Predicated region
    $region2: #{tpu_custom_call.1} parent=1 // pred_check
      _
    $region3: #{tpu_custom_call.1} parent=1 // pred_check_branch
      %16 = sbr.rel (0) target = $region5
    $region4: #{tpu_custom_call.1} parent=1 // pred_region
      %s18 = ssub.s32 192, 192
      %19 = vsyncadd [#allocation3], %s18
      %s21 = sshll.u32 [#allocation2], 4
      %s22 = int_to_ptr.vmem [resolvable:$true] %s21
      %24 = dma.hbm_to_vmem [thread:$0]  %s0, 192, %s22, [#allocation3]
    $region5: #{tpu_custom_call.1} parent=1 // pred_fallthru
      _
    // Predicated region
    $region6: #{tpu_custom_call.1} parent=1 // pred_check
      _
    $region7: #{tpu_custom_call.1} parent=1 // pred_check_branch
      %26 = sbr.rel (0) target = $region9
    $region8: #{tpu_custom_call.1} parent=1 // pred_region
      _
    $region9: #{tpu_custom_call.1} parent=1 // pred_fallthru
      _
    // Predicated region
    $region10: #{tpu_custom_call.1} parent=1 // pred_check
      _
    $region11: #{tpu_custom_call.1} parent=1 // pred_check_branch
      %28 = sbr.rel (0) target = $region13
    $region12: #{tpu_custom_call.1} parent=1 // pred_region
      _
    $region13: #{tpu_custom_call.1} parent=1 // pred_fallthru
      _
    // Predicated region
    $region14: #{tpu_custom_call.1} parent=1 // pred_check
      _
    $region15: #{tpu_custom_call.1} parent=1 // pred_check_branch
      %30 = sbr.rel (0) target = $region17
    $region16: #{tpu_custom_call.1} parent=1 // pred_region
      %s32 = ssub.s32 73728, 73728
      %33 = vsyncadd [#allocation6], %s32
      %s34 = sshll.u32 [#allocation5], 4
      %s35 = int_to_ptr.vmem [resolvable:$true] %s34
      %40 = dma.hbm_to_vmem [thread:$0]  %s3, 73728, %s35, [#allocation6], 768, 768, 48
    $region17: #{tpu_custom_call.1} parent=1 // pred_fallthru
      _
    // Predicated region
    $region18: #{tpu_custom_call.1} parent=1 // pred_check
      _
    $region19: #{tpu_custom_call.1} parent=1 // pred_check_branch
      %42 = sbr.rel (0) target = $region21
    $region20: #{tpu_custom_call.1} parent=1 // pred_region
      %s44 = ssub.s32 96, 96
      %45 = vsyncadd [#allocation6], %s44
      %s47 = sshll.u32 [#allocation7], 4
      %s48 = int_to_ptr.vmem [resolvable:$true] %s47
      %50 = dma.hbm_to_vmem [thread:$0]  %s4, 96, %s48, [#allocation6]
    $region21: #{tpu_custom_call.1} parent=1 // pred_fallthru
      _
    // Predicated region
    $region22: #{tpu_custom_call.1} parent=1 // pred_check
      _
    $region23: #{tpu_custom_call.1} parent=1 // pred_check_branch
      %52 = sbr.rel (0) target = $region25
    $region24: #{tpu_custom_call.1} parent=1 // pred_region
      %s54 = ssub.s32 96, 96
      %55 = vsyncadd [#allocation9], %s54
      %s57 = sshll.u32 [#allocation8], 4
      %s58 = int_to_ptr.vmem [resolvable:$true] %s57
      %60 = dma.hbm_to_vmem [thread:$0]  %s5, 96, %s58, [#allocation9]
    $region25: #{tpu_custom_call.1} parent=1 // pred_fallthru
      _
    // Predicated region
    $region26: #{tpu_custom_call.1} parent=1 // pred_check
      _
    $region27: #{tpu_custom_call.1} parent=1 // pred_check_branch
      %62 = sbr.rel (0) target = $region29
    $region28: #{tpu_custom_call.1} parent=1 // pred_region
      %63 = dma.done [#allocation3], 192
    $region29: #{tpu_custom_call.1} parent=1 // pred_fallthru
      _
    // Predicated region
    $region30: #{tpu_custom_call.1} parent=1 // pred_check
      _
    $region31: #{tpu_custom_call.1} parent=1 // pred_check_branch
      %65 = sbr.rel (0) target = $region33
    $region32: #{tpu_custom_call.1} parent=1 // pred_region
      %66 = dma.done [#allocation6], 73728
    $region33: #{tpu_custom_call.1} parent=1 // pred_fallthru
      _
    // Predicated region
    $region34: #{tpu_custom_call.1} parent=1 // pred_check
      _
    $region35: #{tpu_custom_call.1} parent=1 // pred_check_branch
      %68 = sbr.rel (0) target = $region37
    $region36: #{tpu_custom_call.1} parent=1 // pred_region
      %69 = dma.done [#allocation6], 96
    $region37: #{tpu_custom_call.1} parent=1 // pred_fallthru
      _
    // Predicated region
    $region38: #{tpu_custom_call.1} parent=1 // pred_check
      _
    $region39: #{tpu_custom_call.1} parent=1 // pred_check_branch
      %71 = sbr.rel (0) target = $region41
    $region40: #{tpu_custom_call.1} parent=1 // pred_region
      %72 = dma.done [#allocation9], 96
    $region41: #{tpu_custom_call.1} parent=1 // pred_fallthru
      _
    %v73 = vld [vmem:[#allocation2] sm:$0xff]
    %v74 = vld [vmem:[#allocation2 + $0x8] sm:$0xf]
    %v75 = vld [vmem:[#allocation5] sm:$0xff]
    %v76 = vld [vmem:[#allocation5 + $0x8] sm:$0xff]
    %v77 = vld [vmem:[#allocation5 + $0x10] sm:$0xff]
    %v78 = vld [vmem:[#allocation5 + $0x18] sm:$0xff]
    %v79 = vld [vmem:[#allocation5 + $0x20] sm:$0xff]
    %v80 = vld [vmem:[#allocation5 + $0x28] sm:$0xff]
    %v81 = vld [vmem:[#allocation5 + $0x30] sm:$0xff]
    %v82 = vld [vmem:[#allocation5 + $0x38] sm:$0xff]
    %v83 = vld [vmem:[#allocation5 + $0x40] sm:$0xff]
    %v84 = vld [vmem:[#allocation5 + $0x48] sm:$0xff]
    %v85 = vld [vmem:[#allocation5 + $0x50] sm:$0xff]
    %v86 = vld [vmem:[#allocation5 + $0x58] sm:$0xff]
    %v87 = vld [vmem:[#allocation5 + $0x60] sm:$0xff]
    %v88 = vld [vmem:[#allocation5 + $0x68] sm:$0xff]
    %v89 = vld [vmem:[#allocation5 + $0x70] sm:$0xff]
    %v90 = vld [vmem:[#allocation5 + $0x78] sm:$0xff]
    %v91 = vld [vmem:[#allocation5 + $0x80] sm:$0xff]
    %v92 = vld [vmem:[#allocation5 + $0x88] sm:$0xff]
    %v93 = vld [vmem:[#allocation5 + $0x90] sm:$0xff]
    %v94 = vld [vmem:[#allocation5 + $0x98] sm:$0xff]
    %v95 = vld [vmem:[#allocation5 + $0xa0] sm:$0xff]
    %v96 = vld [vmem:[#allocation5 + $0xa8] sm:$0xff]
    %v97 = vld [vmem:[#allocation5 + $0xb0] sm:$0xff]
    %v98 = vld [vmem:[#allocation5 + $0xb8] sm:$0xff]
    %v99 = vld [vmem:[#allocation5 + $0xc0] sm:$0xff]
    %v100 = vld [vmem:[#allocation5 + $0xc8] sm:$0xff]
    %v101 = vld [vmem:[#allocation5 + $0xd0] sm:$0xff]
    %v102 = vld [vmem:[#allocation5 + $0xd8] sm:$0xff]
    %v103 = vld [vmem:[#allocation5 + $0xe0] sm:$0xff]
    %v104 = vld [vmem:[#allocation5 + $0xe8] sm:$0xff]
    %v105 = vld [vmem:[#allocation5 + $0xf0] sm:$0xff]
    %v106 = vld [vmem:[#allocation5 + $0xf8] sm:$0xff]
    %v107 = vld [vmem:[#allocation5 + $0x100] sm:$0xff]
    %v108 = vld [vmem:[#allocation5 + $0x108] sm:$0xff]
    %v109 = vld [vmem:[#allocation5 + $0x110] sm:$0xff]
    %v110 = vld [vmem:[#allocation5 + $0x118] sm:$0xff]
    %v111 = vld [vmem:[#allocation5 + $0x120] sm:$0xff]
    %v112 = vld [vmem:[#allocation5 + $0x128] sm:$0xff]
    %v113 = vld [vmem:[#allocation5 + $0x130] sm:$0xff]
    %v114 = vld [vmem:[#allocation5 + $0x138] sm:$0xff]
    %v115 = vld [vmem:[#allocation5 + $0x140] sm:$0xff]
    %v116 = vld [vmem:[#allocation5 + $0x148] sm:$0xff]
    %v117 = vld [vmem:[#allocation5 + $0x150] sm:$0xff]
    %v118 = vld [vmem:[#allocation5 + $0x158] sm:$0xff]
    %v119 = vld [vmem:[#allocation5 + $0x160] sm:$0xff]
    %v120 = vld [vmem:[#allocation5 + $0x168] sm:$0xff]
    %v121 = vld [vmem:[#allocation5 + $0x170] sm:$0xff]
    %v122 = vld [vmem:[#allocation5 + $0x178] sm:$0xff]
    %v123 = vld [vmem:[#allocation5 + $0x180] sm:$0xff]
    %v124 = vld [vmem:[#allocation5 + $0x188] sm:$0xff]
    %v125 = vld [vmem:[#allocation5 + $0x190] sm:$0xff]
    %v126 = vld [vmem:[#allocation5 + $0x198] sm:$0xff]
    %v127 = vld [vmem:[#allocation5 + $0x1a0] sm:$0xff]
    %v128 = vld [vmem:[#allocation5 + $0x1a8] sm:$0xff]
    %v129 = vld [vmem:[#allocation5 + $0x1b0] sm:$0xff]
    %v130 = vld [vmem:[#allocation5 + $0x1b8] sm:$0xff]
    %v131 = vld [vmem:[#allocation5 + $0x1c0] sm:$0xff]
    %v132 = vld [vmem:[#allocation5 + $0x1c8] sm:$0xff]
    %v133 = vld [vmem:[#allocation5 + $0x1d0] sm:$0xff]
    %v134 = vld [vmem:[#allocation5 + $0x1d8] sm:$0xff]
    %v135 = vld [vmem:[#allocation5 + $0x1e0] sm:$0xff]
    %v136 = vld [vmem:[#allocation5 + $0x1e8] sm:$0xff]
    %v137 = vld [vmem:[#allocation5 + $0x1f0] sm:$0xff]
    %v138 = vld [vmem:[#allocation5 + $0x1f8] sm:$0xff]
    %v139 = vld [vmem:[#allocation5 + $0x200] sm:$0xff]
    %v140 = vld [vmem:[#allocation5 + $0x208] sm:$0xff]
    %v141 = vld [vmem:[#allocation5 + $0x210] sm:$0xff]
    %v142 = vld [vmem:[#allocation5 + $0x218] sm:$0xff]
    %v143 = vld [vmem:[#allocation5 + $0x220] sm:$0xff]
    %v144 = vld [vmem:[#allocation5 + $0x228] sm:$0xff]
    %v145 = vld [vmem:[#allocation5 + $0x230] sm:$0xff]
    %v146 = vld [vmem:[#allocation5 + $0x238] sm:$0xff]
    %v147 = vld [vmem:[#allocation5 + $0x240] sm:$0xff]
    %v148 = vld [vmem:[#allocation5 + $0x248] sm:$0xff]
    %v149 = vld [vmem:[#allocation5 + $0x250] sm:$0xff]
    %v150 = vld [vmem:[#allocation5 + $0x258] sm:$0xff]
    %v151 = vld [vmem:[#allocation5 + $0x260] sm:$0xff]
    %v152 = vld [vmem:[#allocation5 + $0x268] sm:$0xff]
    %v153 = vld [vmem:[#allocation5 + $0x270] sm:$0xff]
    %v154 = vld [vmem:[#allocation5 + $0x278] sm:$0xff]
    %v155 = vld [vmem:[#allocation5 + $0x280] sm:$0xff]
    %v156 = vld [vmem:[#allocation5 + $0x288] sm:$0xff]
    %v157 = vld [vmem:[#allocation5 + $0x290] sm:$0xff]
    %v158 = vld [vmem:[#allocation5 + $0x298] sm:$0xff]
    %v159 = vld [vmem:[#allocation5 + $0x2a0] sm:$0xff]
    %v160 = vld [vmem:[#allocation5 + $0x2a8] sm:$0xff]
    %v161 = vld [vmem:[#allocation5 + $0x2b0] sm:$0xff]
    %v162 = vld [vmem:[#allocation5 + $0x2b8] sm:$0xff]
    %v163 = vld [vmem:[#allocation5 + $0x2c0] sm:$0xff]
    %v164 = vld [vmem:[#allocation5 + $0x2c8] sm:$0xff]
    %v165 = vld [vmem:[#allocation5 + $0x2d0] sm:$0xff]
    %v166 = vld [vmem:[#allocation5 + $0x2d8] sm:$0xff]
    %v167 = vld [vmem:[#allocation5 + $0x2e0] sm:$0xff]
    %v168 = vld [vmem:[#allocation5 + $0x2e8] sm:$0xff]
    %v169 = vld [vmem:[#allocation5 + $0x2f0] sm:$0xff]
    %v170 = vld [vmem:[#allocation5 + $0x2f8] sm:$0xff]
    %v171 = vld [vmem:[#allocation5 + $0x300] sm:$0xff]
    %v172 = vld [vmem:[#allocation5 + $0x308] sm:$0xff]
    %v173 = vld [vmem:[#allocation5 + $0x310] sm:$0xff]
    %v174 = vld [vmem:[#allocation5 + $0x318] sm:$0xff]
    %v175 = vld [vmem:[#allocation5 + $0x320] sm:$0xff]
    %v176 = vld [vmem:[#allocation5 + $0x328] sm:$0xff]
    %v177 = vld [vmem:[#allocation5 + $0x330] sm:$0xff]
    %v178 = vld [vmem:[#allocation5 + $0x338] sm:$0xff]
    %v179 = vld [vmem:[#allocation5 + $0x340] sm:$0xff]
    %v180 = vld [vmem:[#allocation5 + $0x348] sm:$0xff]
    %v181 = vld [vmem:[#allocation5 + $0x350] sm:$0xff]
    %v182 = vld [vmem:[#allocation5 + $0x358] sm:$0xff]
    %v183 = vld [vmem:[#allocation5 + $0x360] sm:$0xff]
    %v184 = vld [vmem:[#allocation5 + $0x368] sm:$0xff]
    %v185 = vld [vmem:[#allocation5 + $0x370] sm:$0xff]
    %v186 = vld [vmem:[#allocation5 + $0x378] sm:$0xff]
    %v187 = vld [vmem:[#allocation5 + $0x380] sm:$0xff]
    %v188 = vld [vmem:[#allocation5 + $0x388] sm:$0xff]
    %v189 = vld [vmem:[#allocation5 + $0x390] sm:$0xff]
    %v190 = vld [vmem:[#allocation5 + $0x398] sm:$0xff]
    %v191 = vld [vmem:[#allocation5 + $0x3a0] sm:$0xff]
    %v192 = vld [vmem:[#allocation5 + $0x3a8] sm:$0xff]
    %v193 = vld [vmem:[#allocation5 + $0x3b0] sm:$0xff]
    %v194 = vld [vmem:[#allocation5 + $0x3b8] sm:$0xff]
    %v195 = vld [vmem:[#allocation5 + $0x3c0] sm:$0xff]
    %v196 = vld [vmem:[#allocation5 + $0x3c8] sm:$0xff]
    %v197 = vld [vmem:[#allocation5 + $0x3d0] sm:$0xff]
    %v198 = vld [vmem:[#allocation5 + $0x3d8] sm:$0xff]
    %v199 = vld [vmem:[#allocation5 + $0x3e0] sm:$0xff]
    %v200 = vld [vmem:[#allocation5 + $0x3e8] sm:$0xff]
    %v201 = vld [vmem:[#allocation5 + $0x3f0] sm:$0xff]
    %v202 = vld [vmem:[#allocation5 + $0x3f8] sm:$0xff]
    %v203 = vld [vmem:[#allocation5 + $0x400] sm:$0xff]
    %v204 = vld [vmem:[#allocation5 + $0x408] sm:$0xff]
    %v205 = vld [vmem:[#allocation5 + $0x410] sm:$0xff]
    %v206 = vld [vmem:[#allocation5 + $0x418] sm:$0xff]
    %v207 = vld [vmem:[#allocation5 + $0x420] sm:$0xff]
    %v208 = vld [vmem:[#allocation5 + $0x428] sm:$0xff]
    %v209 = vld [vmem:[#allocation5 + $0x430] sm:$0xff]
    %v210 = vld [vmem:[#allocation5 + $0x438] sm:$0xff]
    %v211 = vld [vmem:[#allocation5 + $0x440] sm:$0xff]
    %v212 = vld [vmem:[#allocation5 + $0x448] sm:$0xff]
    %v213 = vld [vmem:[#allocation5 + $0x450] sm:$0xff]
    %v214 = vld [vmem:[#allocation5 + $0x458] sm:$0xff]
    %v215 = vld [vmem:[#allocation5 + $0x460] sm:$0xff]
    %v216 = vld [vmem:[#allocation5 + $0x468] sm:$0xff]
    %v217 = vld [vmem:[#allocation5 + $0x470] sm:$0xff]
    %v218 = vld [vmem:[#allocation5 + $0x478] sm:$0xff]
    %v219 = vld [vmem:[#allocation5 + $0x480] sm:$0xff]
    %v220 = vld [vmem:[#allocation5 + $0x488] sm:$0xff]
    %v221 = vld [vmem:[#allocation5 + $0x490] sm:$0xff]
    %v222 = vld [vmem:[#allocation5 + $0x498] sm:$0xff]
    %v223 = vld [vmem:[#allocation5 + $0x4a0] sm:$0xff]
    %v224 = vld [vmem:[#allocation5 + $0x4a8] sm:$0xff]
    %v225 = vld [vmem:[#allocation5 + $0x4b0] sm:$0xff]
    %v226 = vld [vmem:[#allocation5 + $0x4b8] sm:$0xff]
    %v227 = vld [vmem:[#allocation5 + $0x4c0] sm:$0xff]
    %v228 = vld [vmem:[#allocation5 + $0x4c8] sm:$0xff]
    %v229 = vld [vmem:[#allocation5 + $0x4d0] sm:$0xff]
    %v230 = vld [vmem:[#allocation5 + $0x4d8] sm:$0xff]
    %v231 = vld [vmem:[#allocation5 + $0x4e0] sm:$0xff]
    %v232 = vld [vmem:[#allocation5 + $0x4e8] sm:$0xff]
    %v233 = vld [vmem:[#allocation5 + $0x4f0] sm:$0xff]
    %v234 = vld [vmem:[#allocation5 + $0x4f8] sm:$0xff]
    %v235 = vld [vmem:[#allocation5 + $0x500] sm:$0xff]
    %v236 = vld [vmem:[#allocation5 + $0x508] sm:$0xff]
    %v237 = vld [vmem:[#allocation5 + $0x510] sm:$0xff]
    %v238 = vld [vmem:[#allocation5 + $0x518] sm:$0xff]
    %v239 = vld [vmem:[#allocation5 + $0x520] sm:$0xff]
    %v240 = vld [vmem:[#allocation5 + $0x528] sm:$0xff]
    %v241 = vld [vmem:[#allocation5 + $0x530] sm:$0xff]
    %v242 = vld [vmem:[#allocation5 + $0x538] sm:$0xff]
    %v243 = vld [vmem:[#allocation5 + $0x540] sm:$0xff]
    %v244 = vld [vmem:[#allocation5 + $0x548] sm:$0xff]
    %v245 = vld [vmem:[#allocation5 + $0x550] sm:$0xff]
    %v246 = vld [vmem:[#allocation5 + $0x558] sm:$0xff]
    %v247 = vld [vmem:[#allocation5 + $0x560] sm:$0xff]
    %v248 = vld [vmem:[#allocation5 + $0x568] sm:$0xff]
    %v249 = vld [vmem:[#allocation5 + $0x570] sm:$0xff]
    %v250 = vld [vmem:[#allocation5 + $0x578] sm:$0xff]
    %v251 = vld [vmem:[#allocation5 + $0x580] sm:$0xff]
    %v252 = vld [vmem:[#allocation5 + $0x588] sm:$0xff]
    %v253 = vld [vmem:[#allocation5 + $0x590] sm:$0xff]
    %v254 = vld [vmem:[#allocation5 + $0x598] sm:$0xff]
    %v255 = vld [vmem:[#allocation5 + $0x5a0] sm:$0xff]
    %v256 = vld [vmem:[#allocation5 + $0x5a8] sm:$0xff]
    %v257 = vld [vmem:[#allocation5 + $0x5b0] sm:$0xff]
    %v258 = vld [vmem:[#allocation5 + $0x5b8] sm:$0xff]
    %v259 = vld [vmem:[#allocation5 + $0x5c0] sm:$0xff]
    %v260 = vld [vmem:[#allocation5 + $0x5c8] sm:$0xff]
    %v261 = vld [vmem:[#allocation5 + $0x5d0] sm:$0xff]
    %v262 = vld [vmem:[#allocation5 + $0x5d8] sm:$0xff]
    %v263 = vld [vmem:[#allocation5 + $0x5e0] sm:$0xff]
    %v264 = vld [vmem:[#allocation5 + $0x5e8] sm:$0xff]
    %v265 = vld [vmem:[#allocation5 + $0x5f0] sm:$0xff]
    %v266 = vld [vmem:[#allocation5 + $0x5f8] sm:$0xff]
    %v267 = vld [vmem:[#allocation5 + $0x600] sm:$0xff]
    %v268 = vld [vmem:[#allocation5 + $0x608] sm:$0xff]
    %v269 = vld [vmem:[#allocation5 + $0x610] sm:$0xff]
    %v270 = vld [vmem:[#allocation5 + $0x618] sm:$0xff]
    %v271 = vld [vmem:[#allocation5 + $0x620] sm:$0xff]
    %v272 = vld [vmem:[#allocation5 + $0x628] sm:$0xff]
    %v273 = vld [vmem:[#allocation5 + $0x630] sm:$0xff]
    %v274 = vld [vmem:[#allocation5 + $0x638] sm:$0xff]
    %v275 = vld [vmem:[#allocation5 + $0x640] sm:$0xff]
    %v276 = vld [vmem:[#allocation5 + $0x648] sm:$0xff]
    %v277 = vld [vmem:[#allocation5 + $0x650] sm:$0xff]
    %v278 = vld [vmem:[#allocation5 + $0x658] sm:$0xff]
    %v279 = vld [vmem:[#allocation5 + $0x660] sm:$0xff]
    %v280 = vld [vmem:[#allocation5 + $0x668] sm:$0xff]
    %v281 = vld [vmem:[#allocation5 + $0x670] sm:$0xff]
    %v282 = vld [vmem:[#allocation5 + $0x678] sm:$0xff]
    %v283 = vld [vmem:[#allocation5 + $0x680] sm:$0xff]
    %v284 = vld [vmem:[#allocation5 + $0x688] sm:$0xff]
    %v285 = vld [vmem:[#allocation5 + $0x690] sm:$0xff]
    %v286 = vld [vmem:[#allocation5 + $0x698] sm:$0xff]
    %v287 = vld [vmem:[#allocation5 + $0x6a0] sm:$0xff]
    %v288 = vld [vmem:[#allocation5 + $0x6a8] sm:$0xff]
    %v289 = vld [vmem:[#allocation5 + $0x6b0] sm:$0xff]
    %v290 = vld [vmem:[#allocation5 + $0x6b8] sm:$0xff]
    %v291 = vld [vmem:[#allocation5 + $0x6c0] sm:$0xff]
    %v292 = vld [vmem:[#allocation5 + $0x6c8] sm:$0xff]
    %v293 = vld [vmem:[#allocation5 + $0x6d0] sm:$0xff]
    %v294 = vld [vmem:[#allocation5 + $0x6d8] sm:$0xff]
    %v295 = vld [vmem:[#allocation5 + $0x6e0] sm:$0xff]
    %v296 = vld [vmem:[#allocation5 + $0x6e8] sm:$0xff]
    %v297 = vld [vmem:[#allocation5 + $0x6f0] sm:$0xff]
    %v298 = vld [vmem:[#allocation5 + $0x6f8] sm:$0xff]
    %v299 = vld [vmem:[#allocation5 + $0x700] sm:$0xff]
    %v300 = vld [vmem:[#allocation5 + $0x708] sm:$0xff]
    %v301 = vld [vmem:[#allocation5 + $0x710] sm:$0xff]
    %v302 = vld [vmem:[#allocation5 + $0x718] sm:$0xff]
    %v303 = vld [vmem:[#allocation5 + $0x720] sm:$0xff]
    %v304 = vld [vmem:[#allocation5 + $0x728] sm:$0xff]
    %v305 = vld [vmem:[#allocation5 + $0x730] sm:$0xff]
    %v306 = vld [vmem:[#allocation5 + $0x738] sm:$0xff]
    %v307 = vld [vmem:[#allocation5 + $0x740] sm:$0xff]
    %v308 = vld [vmem:[#allocation5 + $0x748] sm:$0xff]
    %v309 = vld [vmem:[#allocation5 + $0x750] sm:$0xff]
    %v310 = vld [vmem:[#allocation5 + $0x758] sm:$0xff]
    %v311 = vld [vmem:[#allocation5 + $0x760] sm:$0xff]
    %v312 = vld [vmem:[#allocation5 + $0x768] sm:$0xff]
    %v313 = vld [vmem:[#allocation5 + $0x770] sm:$0xff]
    %v314 = vld [vmem:[#allocation5 + $0x778] sm:$0xff]
    %v315 = vld [vmem:[#allocation5 + $0x780] sm:$0xff]
    %v316 = vld [vmem:[#allocation5 + $0x788] sm:$0xff]
    %v317 = vld [vmem:[#allocation5 + $0x790] sm:$0xff]
    %v318 = vld [vmem:[#allocation5 + $0x798] sm:$0xff]
    %v319 = vld [vmem:[#allocation5 + $0x7a0] sm:$0xff]
    %v320 = vld [vmem:[#allocation5 + $0x7a8] sm:$0xff]
    %v321 = vld [vmem:[#allocation5 + $0x7b0] sm:$0xff]
    %v322 = vld [vmem:[#allocation5 + $0x7b8] sm:$0xff]
    %v323 = vld [vmem:[#allocation5 + $0x7c0] sm:$0xff]
    %v324 = vld [vmem:[#allocation5 + $0x7c8] sm:$0xff]
    %v325 = vld [vmem:[#allocation5 + $0x7d0] sm:$0xff]
    %v326 = vld [vmem:[#allocation5 + $0x7d8] sm:$0xff]
    %v327 = vld [vmem:[#allocation5 + $0x7e0] sm:$0xff]
    %v328 = vld [vmem:[#allocation5 + $0x7e8] sm:$0xff]
    %v329 = vld [vmem:[#allocation5 + $0x7f0] sm:$0xff]
    %v330 = vld [vmem:[#allocation5 + $0x7f8] sm:$0xff]
    %v331 = vld [vmem:[#allocation5 + $0x800] sm:$0xff]
    %v332 = vld [vmem:[#allocation5 + $0x808] sm:$0xff]
    %v333 = vld [vmem:[#allocation5 + $0x810] sm:$0xff]
    %v334 = vld [vmem:[#allocation5 + $0x818] sm:$0xff]
    %v335 = vld [vmem:[#allocation5 + $0x820] sm:$0xff]
    %v336 = vld [vmem:[#allocation5 + $0x828] sm:$0xff]
    %v337 = vld [vmem:[#allocation5 + $0x830] sm:$0xff]
    %v338 = vld [vmem:[#allocation5 + $0x838] sm:$0xff]
    %v339 = vld [vmem:[#allocation5 + $0x840] sm:$0xff]
    %v340 = vld [vmem:[#allocation5 + $0x848] sm:$0xff]
    %v341 = vld [vmem:[#allocation5 + $0x850] sm:$0xff]
    %v342 = vld [vmem:[#allocation5 + $0x858] sm:$0xff]
    %v343 = vld [vmem:[#allocation5 + $0x860] sm:$0xff]
    %v344 = vld [vmem:[#allocation5 + $0x868] sm:$0xff]
    %v345 = vld [vmem:[#allocation5 + $0x870] sm:$0xff]
    %v346 = vld [vmem:[#allocation5 + $0x878] sm:$0xff]
    %v347 = vld [vmem:[#allocation5 + $0x880] sm:$0xff]
    %v348 = vld [vmem:[#allocation5 + $0x888] sm:$0xff]
    %v349 = vld [vmem:[#allocation5 + $0x890] sm:$0xff]
    %v350 = vld [vmem:[#allocation5 + $0x898] sm:$0xff]
    %v351 = vld [vmem:[#allocation5 + $0x8a0] sm:$0xff]
    %v352 = vld [vmem:[#allocation5 + $0x8a8] sm:$0xff]
    %v353 = vld [vmem:[#allocation5 + $0x8b0] sm:$0xff]
    %v354 = vld [vmem:[#allocation5 + $0x8b8] sm:$0xff]
    %v355 = vld [vmem:[#allocation5 + $0x8c0] sm:$0xff]
    %v356 = vld [vmem:[#allocation5 + $0x8c8] sm:$0xff]
    %v357 = vld [vmem:[#allocation5 + $0x8d0] sm:$0xff]
    %v358 = vld [vmem:[#allocation5 + $0x8d8] sm:$0xff]
    %v359 = vld [vmem:[#allocation5 + $0x8e0] sm:$0xff]
    %v360 = vld [vmem:[#allocation5 + $0x8e8] sm:$0xff]
    %v361 = vld [vmem:[#allocation5 + $0x8f0] sm:$0xff]
    %v362 = vld [vmem:[#allocation5 + $0x8f8] sm:$0xff]
    %v363 = vld [vmem:[#allocation5 + $0x900] sm:$0xff]
    %v364 = vld [vmem:[#allocation5 + $0x908] sm:$0xff]
    %v365 = vld [vmem:[#allocation5 + $0x910] sm:$0xff]
    %v366 = vld [vmem:[#allocation5 + $0x918] sm:$0xff]
    %v367 = vld [vmem:[#allocation5 + $0x920] sm:$0xff]
    %v368 = vld [vmem:[#allocation5 + $0x928] sm:$0xff]
    %v369 = vld [vmem:[#allocation5 + $0x930] sm:$0xff]
    %v370 = vld [vmem:[#allocation5 + $0x938] sm:$0xff]
    %v371 = vld [vmem:[#allocation5 + $0x940] sm:$0xff]
    %v372 = vld [vmem:[#allocation5 + $0x948] sm:$0xff]
    %v373 = vld [vmem:[#allocation5 + $0x950] sm:$0xff]
    %v374 = vld [vmem:[#allocation5 + $0x958] sm:$0xff]
    %v375 = vld [vmem:[#allocation5 + $0x960] sm:$0xff]
    %v376 = vld [vmem:[#allocation5 + $0x968] sm:$0xff]
    %v377 = vld [vmem:[#allocation5 + $0x970] sm:$0xff]
    %v378 = vld [vmem:[#allocation5 + $0x978] sm:$0xff]
    %v379 = vld [vmem:[#allocation5 + $0x980] sm:$0xff]
    %v380 = vld [vmem:[#allocation5 + $0x988] sm:$0xff]
    %v381 = vld [vmem:[#allocation5 + $0x990] sm:$0xff]
    %v382 = vld [vmem:[#allocation5 + $0x998] sm:$0xff]
    %v383 = vld [vmem:[#allocation5 + $0x9a0] sm:$0xff]
    %v384 = vld [vmem:[#allocation5 + $0x9a8] sm:$0xff]
    %v385 = vld [vmem:[#allocation5 + $0x9b0] sm:$0xff]
    %v386 = vld [vmem:[#allocation5 + $0x9b8] sm:$0xff]
    %v387 = vld [vmem:[#allocation5 + $0x9c0] sm:$0xff]
    %v388 = vld [vmem:[#allocation5 + $0x9c8] sm:$0xff]
    %v389 = vld [vmem:[#allocation5 + $0x9d0] sm:$0xff]
    %v390 = vld [vmem:[#allocation5 + $0x9d8] sm:$0xff]
    %v391 = vld [vmem:[#allocation5 + $0x9e0] sm:$0xff]
    %v392 = vld [vmem:[#allocation5 + $0x9e8] sm:$0xff]
    %v393 = vld [vmem:[#allocation5 + $0x9f0] sm:$0xff]
    %v394 = vld [vmem:[#allocation5 + $0x9f8] sm:$0xff]
    %v395 = vld [vmem:[#allocation5 + $0xa00] sm:$0xff]
    %v396 = vld [vmem:[#allocation5 + $0xa08] sm:$0xff]
    %v397 = vld [vmem:[#allocation5 + $0xa10] sm:$0xff]
    %v398 = vld [vmem:[#allocation5 + $0xa18] sm:$0xff]
    %v399 = vld [vmem:[#allocation5 + $0xa20] sm:$0xff]
    %v400 = vld [vmem:[#allocation5 + $0xa28] sm:$0xff]
    %v401 = vld [vmem:[#allocation5 + $0xa30] sm:$0xff]
    %v402 = vld [vmem:[#allocation5 + $0xa38] sm:$0xff]
    %v403 = vld [vmem:[#allocation5 + $0xa40] sm:$0xff]
    %v404 = vld [vmem:[#allocation5 + $0xa48] sm:$0xff]
    %v405 = vld [vmem:[#allocation5 + $0xa50] sm:$0xff]
    %v406 = vld [vmem:[#allocation5 + $0xa58] sm:$0xff]
    %v407 = vld [vmem:[#allocation5 + $0xa60] sm:$0xff]
    %v408 = vld [vmem:[#allocation5 + $0xa68] sm:$0xff]
    %v409 = vld [vmem:[#allocation5 + $0xa70] sm:$0xff]
    %v410 = vld [vmem:[#allocation5 + $0xa78] sm:$0xff]
    %v411 = vld [vmem:[#allocation5 + $0xa80] sm:$0xff]
    %v412 = vld [vmem:[#allocation5 + $0xa88] sm:$0xff]
    %v413 = vld [vmem:[#allocation5 + $0xa90] sm:$0xff]
    %v414 = vld [vmem:[#allocation5 + $0xa98] sm:$0xff]
    %v415 = vld [vmem:[#allocation5 + $0xaa0] sm:$0xff]
    %v416 = vld [vmem:[#allocation5 + $0xaa8] sm:$0xff]
    %v417 = vld [vmem:[#allocation5 + $0xab0] sm:$0xff]
    %v418 = vld [vmem:[#allocation5 + $0xab8] sm:$0xff]
    %v419 = vld [vmem:[#allocation5 + $0xac0] sm:$0xff]
    %v420 = vld [vmem:[#allocation5 + $0xac8] sm:$0xff]
    %v421 = vld [vmem:[#allocation5 + $0xad0] sm:$0xff]
    %v422 = vld [vmem:[#allocation5 + $0xad8] sm:$0xff]
    %v423 = vld [vmem:[#allocation5 + $0xae0] sm:$0xff]
    %v424 = vld [vmem:[#allocation5 + $0xae8] sm:$0xff]
    %v425 = vld [vmem:[#allocation5 + $0xaf0] sm:$0xff]
    %v426 = vld [vmem:[#allocation5 + $0xaf8] sm:$0xff]
    %v427 = vld [vmem:[#allocation5 + $0xb00] sm:$0xff]
    %v428 = vld [vmem:[#allocation5 + $0xb08] sm:$0xff]
    %v429 = vld [vmem:[#allocation5 + $0xb10] sm:$0xff]
    %v430 = vld [vmem:[#allocation5 + $0xb18] sm:$0xff]
    %v431 = vld [vmem:[#allocation5 + $0xb20] sm:$0xff]
    %v432 = vld [vmem:[#allocation5 + $0xb28] sm:$0xff]
    %v433 = vld [vmem:[#allocation5 + $0xb30] sm:$0xff]
    %v434 = vld [vmem:[#allocation5 + $0xb38] sm:$0xff]
    %v435 = vld [vmem:[#allocation5 + $0xb40] sm:$0xff]
    %v436 = vld [vmem:[#allocation5 + $0xb48] sm:$0xff]
    %v437 = vld [vmem:[#allocation5 + $0xb50] sm:$0xff]
    %v438 = vld [vmem:[#allocation5 + $0xb58] sm:$0xff]
    %v439 = vld [vmem:[#allocation5 + $0xb60] sm:$0xff]
    %v440 = vld [vmem:[#allocation5 + $0xb68] sm:$0xff]
    %v441 = vld [vmem:[#allocation5 + $0xb70] sm:$0xff]
    %v442 = vld [vmem:[#allocation5 + $0xb78] sm:$0xff]
    %v443 = vld [vmem:[#allocation5 + $0xb80] sm:$0xff]
    %v444 = vld [vmem:[#allocation5 + $0xb88] sm:$0xff]
    %v445 = vld [vmem:[#allocation5 + $0xb90] sm:$0xff]
    %v446 = vld [vmem:[#allocation5 + $0xb98] sm:$0xff]
    %v447 = vld [vmem:[#allocation5 + $0xba0] sm:$0xff]
    %v448 = vld [vmem:[#allocation5 + $0xba8] sm:$0xff]
    %v449 = vld [vmem:[#allocation5 + $0xbb0] sm:$0xff]
    %v450 = vld [vmem:[#allocation5 + $0xbb8] sm:$0xff]
    %v451 = vld [vmem:[#allocation5 + $0xbc0] sm:$0xff]
    %v452 = vld [vmem:[#allocation5 + $0xbc8] sm:$0xff]
    %v453 = vld [vmem:[#allocation5 + $0xbd0] sm:$0xff]
    %v454 = vld [vmem:[#allocation5 + $0xbd8] sm:$0xff]
    %v455 = vld [vmem:[#allocation5 + $0xbe0] sm:$0xff]
    %v456 = vld [vmem:[#allocation5 + $0xbe8] sm:$0xff]
    %v457 = vld [vmem:[#allocation5 + $0xbf0] sm:$0xff]
    %v458 = vld [vmem:[#allocation5 + $0xbf8] sm:$0xff]
    %v459 = vld [vmem:[#allocation5 + $0xc00] sm:$0xff]
    %v460 = vld [vmem:[#allocation5 + $0xc08] sm:$0xff]
    %v461 = vld [vmem:[#allocation5 + $0xc10] sm:$0xff]
    %v462 = vld [vmem:[#allocation5 + $0xc18] sm:$0xff]
    %v463 = vld [vmem:[#allocation5 + $0xc20] sm:$0xff]
    %v464 = vld [vmem:[#allocation5 + $0xc28] sm:$0xff]
    %v465 = vld [vmem:[#allocation5 + $0xc30] sm:$0xff]
    %v466 = vld [vmem:[#allocation5 + $0xc38] sm:$0xff]
    %v467 = vld [vmem:[#allocation5 + $0xc40] sm:$0xff]
    %v468 = vld [vmem:[#allocation5 + $0xc48] sm:$0xff]
    %v469 = vld [vmem:[#allocation5 + $0xc50] sm:$0xff]
    %v470 = vld [vmem:[#allocation5 + $0xc58] sm:$0xff]
    %v471 = vld [vmem:[#allocation5 + $0xc60] sm:$0xff]
    %v472 = vld [vmem:[#allocation5 + $0xc68] sm:$0xff]
    %v473 = vld [vmem:[#allocation5 + $0xc70] sm:$0xff]
    %v474 = vld [vmem:[#allocation5 + $0xc78] sm:$0xff]
    %v475 = vld [vmem:[#allocation5 + $0xc80] sm:$0xff]
    %v476 = vld [vmem:[#allocation5 + $0xc88] sm:$0xff]
    %v477 = vld [vmem:[#allocation5 + $0xc90] sm:$0xff]
    %v478 = vld [vmem:[#allocation5 + $0xc98] sm:$0xff]
    %v479 = vld [vmem:[#allocation5 + $0xca0] sm:$0xff]
    %v480 = vld [vmem:[#allocation5 + $0xca8] sm:$0xff]
    %v481 = vld [vmem:[#allocation5 + $0xcb0] sm:$0xff]
    %v482 = vld [vmem:[#allocation5 + $0xcb8] sm:$0xff]
    %v483 = vld [vmem:[#allocation5 + $0xcc0] sm:$0xff]
    %v484 = vld [vmem:[#allocation5 + $0xcc8] sm:$0xff]
    %v485 = vld [vmem:[#allocation5 + $0xcd0] sm:$0xff]
    %v486 = vld [vmem:[#allocation5 + $0xcd8] sm:$0xff]
    %v487 = vld [vmem:[#allocation5 + $0xce0] sm:$0xff]
    %v488 = vld [vmem:[#allocation5 + $0xce8] sm:$0xff]
    %v489 = vld [vmem:[#allocation5 + $0xcf0] sm:$0xff]
    %v490 = vld [vmem:[#allocation5 + $0xcf8] sm:$0xff]
    %v491 = vld [vmem:[#allocation5 + $0xd00] sm:$0xff]
    %v492 = vld [vmem:[#allocation5 + $0xd08] sm:$0xff]
    %v493 = vld [vmem:[#allocation5 + $0xd10] sm:$0xff]
    %v494 = vld [vmem:[#allocation5 + $0xd18] sm:$0xff]
    %v495 = vld [vmem:[#allocation5 + $0xd20] sm:$0xff]
    %v496 = vld [vmem:[#allocation5 + $0xd28] sm:$0xff]
    %v497 = vld [vmem:[#allocation5 + $0xd30] sm:$0xff]
    %v498 = vld [vmem:[#allocation5 + $0xd38] sm:$0xff]
    %v499 = vld [vmem:[#allocation5 + $0xd40] sm:$0xff]
    %v500 = vld [vmem:[#allocation5 + $0xd48] sm:$0xff]
    %v501 = vld [vmem:[#allocation5 + $0xd50] sm:$0xff]
    %v502 = vld [vmem:[#allocation5 + $0xd58] sm:$0xff]
    %v503 = vld [vmem:[#allocation5 + $0xd60] sm:$0xff]
    %v504 = vld [vmem:[#allocation5 + $0xd68] sm:$0xff]
    %v505 = vld [vmem:[#allocation5 + $0xd70] sm:$0xff]
    %v506 = vld [vmem:[#allocation5 + $0xd78] sm:$0xff]
    %v507 = vld [vmem:[#allocation5 + $0xd80] sm:$0xff]
    %v508 = vld [vmem:[#allocation5 + $0xd88] sm:$0xff]
    %v509 = vld [vmem:[#allocation5 + $0xd90] sm:$0xff]
    %v510 = vld [vmem:[#allocation5 + $0xd98] sm:$0xff]
    %v511 = vld [vmem:[#allocation5 + $0xda0] sm:$0xff]
    %v512 = vld [vmem:[#allocation5 + $0xda8] sm:$0xff]
    %v513 = vld [vmem:[#allocation5 + $0xdb0] sm:$0xff]
    %v514 = vld [vmem:[#allocation5 + $0xdb8] sm:$0xff]
    %v515 = vld [vmem:[#allocation5 + $0xdc0] sm:$0xff]
    %v516 = vld [vmem:[#allocation5 + $0xdc8] sm:$0xff]
    %v517 = vld [vmem:[#allocation5 + $0xdd0] sm:$0xff]
    %v518 = vld [vmem:[#allocation5 + $0xdd8] sm:$0xff]
    %v519 = vld [vmem:[#allocation5 + $0xde0] sm:$0xff]
    %v520 = vld [vmem:[#allocation5 + $0xde8] sm:$0xff]
    %v521 = vld [vmem:[#allocation5 + $0xdf0] sm:$0xff]
    %v522 = vld [vmem:[#allocation5 + $0xdf8] sm:$0xff]
    %v523 = vld [vmem:[#allocation5 + $0xe00] sm:$0xff]
    %v524 = vld [vmem:[#allocation5 + $0xe08] sm:$0xff]
    %v525 = vld [vmem:[#allocation5 + $0xe10] sm:$0xff]
    %v526 = vld [vmem:[#allocation5 + $0xe18] sm:$0xff]
    %v527 = vld [vmem:[#allocation5 + $0xe20] sm:$0xff]
    %v528 = vld [vmem:[#allocation5 + $0xe28] sm:$0xff]
    %v529 = vld [vmem:[#allocation5 + $0xe30] sm:$0xff]
    %v530 = vld [vmem:[#allocation5 + $0xe38] sm:$0xff]
    %v531 = vld [vmem:[#allocation5 + $0xe40] sm:$0xff]
    %v532 = vld [vmem:[#allocation5 + $0xe48] sm:$0xff]
    %v533 = vld [vmem:[#allocation5 + $0xe50] sm:$0xff]
    %v534 = vld [vmem:[#allocation5 + $0xe58] sm:$0xff]
    %v535 = vld [vmem:[#allocation5 + $0xe60] sm:$0xff]
    %v536 = vld [vmem:[#allocation5 + $0xe68] sm:$0xff]
    %v537 = vld [vmem:[#allocation5 + $0xe70] sm:$0xff]
    %v538 = vld [vmem:[#allocation5 + $0xe78] sm:$0xff]
    %v539 = vld [vmem:[#allocation5 + $0xe80] sm:$0xff]
    %v540 = vld [vmem:[#allocation5 + $0xe88] sm:$0xff]
    %v541 = vld [vmem:[#allocation5 + $0xe90] sm:$0xff]
    %v542 = vld [vmem:[#allocation5 + $0xe98] sm:$0xff]
    %v543 = vld [vmem:[#allocation5 + $0xea0] sm:$0xff]
    %v544 = vld [vmem:[#allocation5 + $0xea8] sm:$0xff]
    %v545 = vld [vmem:[#allocation5 + $0xeb0] sm:$0xff]
    %v546 = vld [vmem:[#allocation5 + $0xeb8] sm:$0xff]
    %v547 = vld [vmem:[#allocation5 + $0xec0] sm:$0xff]
    %v548 = vld [vmem:[#allocation5 + $0xec8] sm:$0xff]
    %v549 = vld [vmem:[#allocation5 + $0xed0] sm:$0xff]
    %v550 = vld [vmem:[#allocation5 + $0xed8] sm:$0xff]
    %v551 = vld [vmem:[#allocation5 + $0xee0] sm:$0xff]
    %v552 = vld [vmem:[#allocation5 + $0xee8] sm:$0xff]
    %v553 = vld [vmem:[#allocation5 + $0xef0] sm:$0xff]
    %v554 = vld [vmem:[#allocation5 + $0xef8] sm:$0xff]
    %v555 = vld [vmem:[#allocation5 + $0xf00] sm:$0xff]
    %v556 = vld [vmem:[#allocation5 + $0xf08] sm:$0xff]
    %v557 = vld [vmem:[#allocation5 + $0xf10] sm:$0xff]
    %v558 = vld [vmem:[#allocation5 + $0xf18] sm:$0xff]
    %v559 = vld [vmem:[#allocation5 + $0xf20] sm:$0xff]
    %v560 = vld [vmem:[#allocation5 + $0xf28] sm:$0xff]
    %v561 = vld [vmem:[#allocation5 + $0xf30] sm:$0xff]
    %v562 = vld [vmem:[#allocation5 + $0xf38] sm:$0xff]
    %v563 = vld [vmem:[#allocation5 + $0xf40] sm:$0xff]
    %v564 = vld [vmem:[#allocation5 + $0xf48] sm:$0xff]
    %v565 = vld [vmem:[#allocation5 + $0xf50] sm:$0xff]
    %v566 = vld [vmem:[#allocation5 + $0xf58] sm:$0xff]
    %v567 = vld [vmem:[#allocation5 + $0xf60] sm:$0xff]
    %v568 = vld [vmem:[#allocation5 + $0xf68] sm:$0xff]
    %v569 = vld [vmem:[#allocation5 + $0xf70] sm:$0xff]
    %v570 = vld [vmem:[#allocation5 + $0xf78] sm:$0xff]
    %v571 = vld [vmem:[#allocation5 + $0xf80] sm:$0xff]
    %v572 = vld [vmem:[#allocation5 + $0xf88] sm:$0xff]
    %v573 = vld [vmem:[#allocation5 + $0xf90] sm:$0xff]
    %v574 = vld [vmem:[#allocation5 + $0xf98] sm:$0xff]
    %v575 = vld [vmem:[#allocation5 + $0xfa0] sm:$0xff]
    %v576 = vld [vmem:[#allocation5 + $0xfa8] sm:$0xff]
    %v577 = vld [vmem:[#allocation5 + $0xfb0] sm:$0xff]
    %v578 = vld [vmem:[#allocation5 + $0xfb8] sm:$0xff]
    %v579 = vld [vmem:[#allocation5 + $0xfc0] sm:$0xff]
    %v580 = vld [vmem:[#allocation5 + $0xfc8] sm:$0xff]
    %v581 = vld [vmem:[#allocation5 + $0xfd0] sm:$0xff]
    %v582 = vld [vmem:[#allocation5 + $0xfd8] sm:$0xff]
    %v583 = vld [vmem:[#allocation5 + $0xfe0] sm:$0xff]
    %v584 = vld [vmem:[#allocation5 + $0xfe8] sm:$0xff]
    %v585 = vld [vmem:[#allocation5 + $0xff0] sm:$0xff]
    %v586 = vld [vmem:[#allocation5 + $0xff8] sm:$0xff]
    %v587 = vld [vmem:[#allocation5 + $0x1000] sm:$0xff]
    %v588 = vld [vmem:[#allocation5 + $0x1008] sm:$0xff]
    %v589 = vld [vmem:[#allocation5 + $0x1010] sm:$0xff]
    %v590 = vld [vmem:[#allocation5 + $0x1018] sm:$0xff]
    %v591 = vld [vmem:[#allocation5 + $0x1020] sm:$0xff]
    %v592 = vld [vmem:[#allocation5 + $0x1028] sm:$0xff]
    %v593 = vld [vmem:[#allocation5 + $0x1030] sm:$0xff]
    %v594 = vld [vmem:[#allocation5 + $0x1038] sm:$0xff]
    %v595 = vld [vmem:[#allocation5 + $0x1040] sm:$0xff]
    %v596 = vld [vmem:[#allocation5 + $0x1048] sm:$0xff]
    %v597 = vld [vmem:[#allocation5 + $0x1050] sm:$0xff]
    %v598 = vld [vmem:[#allocation5 + $0x1058] sm:$0xff]
    %v599 = vld [vmem:[#allocation5 + $0x1060] sm:$0xff]
    %v600 = vld [vmem:[#allocation5 + $0x1068] sm:$0xff]
    %v601 = vld [vmem:[#allocation5 + $0x1070] sm:$0xff]
    %v602 = vld [vmem:[#allocation5 + $0x1078] sm:$0xff]
    %v603 = vld [vmem:[#allocation5 + $0x1080] sm:$0xff]
    %v604 = vld [vmem:[#allocation5 + $0x1088] sm:$0xff]
    %v605 = vld [vmem:[#allocation5 + $0x1090] sm:$0xff]
    %v606 = vld [vmem:[#allocation5 + $0x1098] sm:$0xff]
    %v607 = vld [vmem:[#allocation5 + $0x10a0] sm:$0xff]
    %v608 = vld [vmem:[#allocation5 + $0x10a8] sm:$0xff]
    %v609 = vld [vmem:[#allocation5 + $0x10b0] sm:$0xff]
    %v610 = vld [vmem:[#allocation5 + $0x10b8] sm:$0xff]
    %v611 = vld [vmem:[#allocation5 + $0x10c0] sm:$0xff]
    %v612 = vld [vmem:[#allocation5 + $0x10c8] sm:$0xff]
    %v613 = vld [vmem:[#allocation5 + $0x10d0] sm:$0xff]
    %v614 = vld [vmem:[#allocation5 + $0x10d8] sm:$0xff]
    %v615 = vld [vmem:[#allocation5 + $0x10e0] sm:$0xff]
    %v616 = vld [vmem:[#allocation5 + $0x10e8] sm:$0xff]
    %v617 = vld [vmem:[#allocation5 + $0x10f0] sm:$0xff]
    %v618 = vld [vmem:[#allocation5 + $0x10f8] sm:$0xff]
    %v619 = vld [vmem:[#allocation5 + $0x1100] sm:$0xff]
    %v620 = vld [vmem:[#allocation5 + $0x1108] sm:$0xff]
    %v621 = vld [vmem:[#allocation5 + $0x1110] sm:$0xff]
    %v622 = vld [vmem:[#allocation5 + $0x1118] sm:$0xff]
    %v623 = vld [vmem:[#allocation5 + $0x1120] sm:$0xff]
    %v624 = vld [vmem:[#allocation5 + $0x1128] sm:$0xff]
    %v625 = vld [vmem:[#allocation5 + $0x1130] sm:$0xff]
    %v626 = vld [vmem:[#allocation5 + $0x1138] sm:$0xff]
    %v627 = vld [vmem:[#allocation5 + $0x1140] sm:$0xff]
    %v628 = vld [vmem:[#allocation5 + $0x1148] sm:$0xff]
    %v629 = vld [vmem:[#allocation5 + $0x1150] sm:$0xff]
    %v630 = vld [vmem:[#allocation5 + $0x1158] sm:$0xff]
    %v631 = vld [vmem:[#allocation5 + $0x1160] sm:$0xff]
    %v632 = vld [vmem:[#allocation5 + $0x1168] sm:$0xff]
    %v633 = vld [vmem:[#allocation5 + $0x1170] sm:$0xff]
    %v634 = vld [vmem:[#allocation5 + $0x1178] sm:$0xff]
    %v635 = vld [vmem:[#allocation5 + $0x1180] sm:$0xff]
    %v636 = vld [vmem:[#allocation5 + $0x1188] sm:$0xff]
    %v637 = vld [vmem:[#allocation5 + $0x1190] sm:$0xff]
    %v638 = vld [vmem:[#allocation5 + $0x1198] sm:$0xff]
    %v639 = vld [vmem:[#allocation5 + $0x11a0] sm:$0xff]
    %v640 = vld [vmem:[#allocation5 + $0x11a8] sm:$0xff]
    %v641 = vld [vmem:[#allocation5 + $0x11b0] sm:$0xff]
    %v642 = vld [vmem:[#allocation5 + $0x11b8] sm:$0xff]
    %v643 = vld [vmem:[#allocation5 + $0x11c0] sm:$0xff]
    %v644 = vld [vmem:[#allocation5 + $0x11c8] sm:$0xff]
    %v645 = vld [vmem:[#allocation5 + $0x11d0] sm:$0xff]
    %v646 = vld [vmem:[#allocation5 + $0x11d8] sm:$0xff]
    %v647 = vld [vmem:[#allocation5 + $0x11e0] sm:$0xff]
    %v648 = vld [vmem:[#allocation5 + $0x11e8] sm:$0xff]
    %v649 = vld [vmem:[#allocation5 + $0x11f0] sm:$0xff]
    %v650 = vld [vmem:[#allocation5 + $0x11f8] sm:$0xff]
    %v653 = vcombine.high %v73, %v73
    %v655 = vunpack.c.l.s4 1983009808
    %v656 = vunpack.c.0.s8 %v655
    %v657 = vlaneseq
    %v658 = vshrl.u32 %v657, 7
    %v659 = vsub.s32 %v656, %v658
    %v660 = vrot.slane %v73, %v659
    %v662 = vunpack.c.l.s4 1983009808
    %v663 = vunpack.c.0.s8 %v662
    %v664 = vlaneseq
    %v665 = vshrl.u32 %v664, 7
    %v666 = vsub.s32 %v663, %v665
    %v667 = vrot.slane %v653, %v666
    %v668 = vcombine.high %v660, %v660
    %v669 = vcombine.high %v667, %v667
    %v671 = vunpack.c.l.s4 1983009808
    %v672 = vunpack.c.0.s8 %v671
    %v673 = vlaneseq
    %v674 = vshrl.u32 %v673, 7
    %v675 = vsub.s32 %v672, %v674
    %v676 = vrot.slane %v74, %v675
    %v677 = vcombine.high %v676, %v676
    %684 = vmatprep.subr.mxu0 %v76
    %685 = vmatpush1.msra.mxu0 %v75
    %686 = vmatprep.subr.mxu0 %v82
    %687 = vmatpush1.msra.mxu0 %v81
    %688 = vmatprep.subr.mxu0 %v88
    %689 = vmatpush1.msra.mxu0 %v87
    %690 = vmatprep.subr.mxu0 %v94
    %691 = vmatpush1.msra.mxu0 %v93
    %692 = vmatprep.subr.mxu0 %v100
    %693 = vmatpush1.msra.mxu0 %v99
    %694 = vmatprep.subr.mxu0 %v106
    %695 = vmatpush1.msra.mxu0 %v105
    %696 = vmatprep.subr.mxu0 %v112
    %697 = vmatpush1.msra.mxu0 %v111
    %698 = vmatprep.subr.mxu0 %v118
    %699 = vmatpush1.msra.mxu0 %v117
    %700 = vmatprep.subr.mxu0 %v124
    %701 = vmatpush1.msra.mxu0 %v123
    %702 = vmatprep.subr.mxu0 %v130
    %703 = vmatpush1.msra.mxu0 %v129
    %704 = vmatprep.subr.mxu0 %v136
    %705 = vmatpush1.msra.mxu0 %v135
    %706 = vmatprep.subr.mxu0 %v142
    %707 = vmatpush1.msra.mxu0 %v141
    %708 = vmatprep.subr.mxu0 %v148
    %709 = vmatpush1.msra.mxu0 %v147
    %710 = vmatprep.subr.mxu0 %v154
    %711 = vmatpush1.msra.mxu0 %v153
    %712 = vmatprep.subr.mxu0 %v160
    %713 = vmatpush1.msra.mxu0 %v159
    %714 = vmatprep.subr.mxu0 %v166
    %715 = vmatpush1.msra.mxu0 %v165
    %716 = vmatprep.subr.mxu0 %v172
    %717 = vmatpush1.msra.mxu0 %v171
    %718 = vmatprep.subr.mxu0 %v178
    %719 = vmatpush1.msra.mxu0 %v177
    %720 = vmatprep.subr.mxu0 %v184
    %721 = vmatpush1.msra.mxu0 %v183
    %722 = vmatprep.subr.mxu0 %v190
    %723 = vmatpush1.msra.mxu0 %v189
    %724 = vmatprep.subr.mxu0 %v196
    %725 = vmatpush1.msra.mxu0 %v195
    %726 = vmatprep.subr.mxu0 %v202
    %727 = vmatpush1.msra.mxu0 %v201
    %728 = vmatprep.subr.mxu0 %v208
    %729 = vmatpush1.msra.mxu0 %v207
    %730 = vmatprep.subr.mxu0 %v214
    %731 = vmatpush1.msra.mxu0 %v213
    %732 = vmatprep.subr.mxu0 %v220
    %733 = vmatpush1.msra.mxu0 %v219
    %734 = vmatprep.subr.mxu0 %v226
    %735 = vmatpush1.msra.mxu0 %v225
    %736 = vmatprep.subr.mxu0 %v232
    %737 = vmatpush1.msra.mxu0 %v231
    %738 = vmatprep.subr.mxu0 %v238
    %739 = vmatpush1.msra.mxu0 %v237
    %740 = vmatprep.subr.mxu0 %v244
    %741 = vmatpush1.msra.mxu0 %v243
    %742 = vmatprep.subr.mxu0 %v250
    %743 = vmatpush1.msra.mxu0 %v249
    %744 = vmatprep.subr.mxu0 %v256
    %745 = vmatpush1.msra.mxu0 %v255
    %746 = vmatprep.subr.mxu0 %v262
    %747 = vmatpush1.msra.mxu0 %v261
    %748 = vmatprep.mubr.f32.mxu0 %v668
    %749 = vmatmul.mubr.f32.gmra.mrb[0].mxu0 %v660
    %v750 = vpop.f32.mrb[0].mxu0
    %v751 = vadd.f32 0.0, %v750
    %v752 = vpop.f32.mrb[0].mxu0
    %v753 = vadd.f32 0.0, %v752
    %754 = vdwg.mxu0
    %755 = vmatprep.subr.mxu0 %v268
    %756 = vmatpush1.msra.mxu0 %v267
    %757 = vmatprep.subr.mxu0 %v274
    %758 = vmatpush1.msra.mxu0 %v273
    %759 = vmatprep.subr.mxu0 %v280
    %760 = vmatpush1.msra.mxu0 %v279
    %761 = vmatprep.subr.mxu0 %v286
    %762 = vmatpush1.msra.mxu0 %v285
    %763 = vmatprep.subr.mxu0 %v292
    %764 = vmatpush1.msra.mxu0 %v291
    %765 = vmatprep.subr.mxu0 %v298
    %766 = vmatpush1.msra.mxu0 %v297
    %767 = vmatprep.subr.mxu0 %v304
    %768 = vmatpush1.msra.mxu0 %v303
    %769 = vmatprep.subr.mxu0 %v310
    %770 = vmatpush1.msra.mxu0 %v309
    %771 = vmatprep.subr.mxu0 %v316
    %772 = vmatpush1.msra.mxu0 %v315
    %773 = vmatprep.subr.mxu0 %v322
    %774 = vmatpush1.msra.mxu0 %v321
    %775 = vmatprep.subr.mxu0 %v328
    %776 = vmatpush1.msra.mxu0 %v327
    %777 = vmatprep.subr.mxu0 %v334
    %778 = vmatpush1.msra.mxu0 %v333
    %779 = vmatprep.subr.mxu0 %v340
    %780 = vmatpush1.msra.mxu0 %v339
    %781 = vmatprep.subr.mxu0 %v346
    %782 = vmatpush1.msra.mxu0 %v345
    %783 = vmatprep.subr.mxu0 %v352
    %784 = vmatpush1.msra.mxu0 %v351
    %785 = vmatprep.subr.mxu0 %v358
    %786 = vmatpush1.msra.mxu0 %v357
    %787 = vmatprep.subr.mxu0 %v364
    %788 = vmatpush1.msra.mxu0 %v363
    %789 = vmatprep.subr.mxu0 %v370
    %790 = vmatpush1.msra.mxu0 %v369
    %791 = vmatprep.subr.mxu0 %v376
    %792 = vmatpush1.msra.mxu0 %v375
    %793 = vmatprep.subr.mxu0 %v382
    %794 = vmatpush1.msra.mxu0 %v381
    %795 = vmatprep.subr.mxu0 %v388
    %796 = vmatpush1.msra.mxu0 %v387
    %797 = vmatprep.subr.mxu0 %v394
    %798 = vmatpush1.msra.mxu0 %v393
    %799 = vmatprep.subr.mxu0 %v400
    %800 = vmatpush1.msra.mxu0 %v399
    %801 = vmatprep.subr.mxu0 %v406
    %802 = vmatpush1.msra.mxu0 %v405
    %803 = vmatprep.subr.mxu0 %v412
    %804 = vmatpush1.msra.mxu0 %v411
    %805 = vmatprep.subr.mxu0 %v418
    %806 = vmatpush1.msra.mxu0 %v417
    %807 = vmatprep.subr.mxu0 %v424
    %808 = vmatpush1.msra.mxu0 %v423
    %809 = vmatprep.subr.mxu0 %v430
    %810 = vmatpush1.msra.mxu0 %v429
    %811 = vmatprep.subr.mxu0 %v436
    %812 = vmatpush1.msra.mxu0 %v435
    %813 = vmatprep.subr.mxu0 %v442
    %814 = vmatpush1.msra.mxu0 %v441
    %815 = vmatprep.subr.mxu0 %v448
    %816 = vmatpush1.msra.mxu0 %v447
    %817 = vmatprep.subr.mxu0 %v454
    %818 = vmatpush1.msra.mxu0 %v453
    %819 = vmatprep.mubr.f32.mxu0 %v669
    %820 = vmatmul.mubr.f32.gmra.mrb[0].mxu0 %v667
    %v821 = vpop.f32.mrb[0].mxu0
    %v822 = vadd.f32 %v751, %v821
    %v823 = vpop.f32.mrb[0].mxu0
    %v824 = vadd.f32 %v753, %v823
    %825 = vdwg.mxu0
    %826 = vmatprep.subr.mxu0 %v460
    %827 = vmatpush1.msra.mxu0 %v459
    %828 = vmatprep.subr.mxu0 %v466
    %829 = vmatpush1.msra.mxu0 %v465
    %830 = vmatprep.subr.mxu0 %v472
    %831 = vmatpush1.msra.mxu0 %v471
    %832 = vmatprep.subr.mxu0 %v478
    %833 = vmatpush1.msra.mxu0 %v477
    %834 = vmatprep.subr.mxu0 %v484
    %835 = vmatpush1.msra.mxu0 %v483
    %836 = vmatprep.subr.mxu0 %v490
    %837 = vmatpush1.msra.mxu0 %v489
    %838 = vmatprep.subr.mxu0 %v496
    %839 = vmatpush1.msra.mxu0 %v495
    %840 = vmatprep.subr.mxu0 %v502
    %841 = vmatpush1.msra.mxu0 %v501
    %842 = vmatprep.subr.mxu0 %v508
    %843 = vmatpush1.msra.mxu0 %v507
    %844 = vmatprep.subr.mxu0 %v514
    %845 = vmatpush1.msra.mxu0 %v513
    %846 = vmatprep.subr.mxu0 %v520
    %847 = vmatpush1.msra.mxu0 %v519
    %848 = vmatprep.subr.mxu0 %v526
    %849 = vmatpush1.msra.mxu0 %v525
    %850 = vmatprep.subr.mxu0 %v532
    %851 = vmatpush1.msra.mxu0 %v531
    %852 = vmatprep.subr.mxu0 %v538
    %853 = vmatpush1.msra.mxu0 %v537
    %854 = vmatprep.subr.mxu0 %v544
    %855 = vmatpush1.msra.mxu0 %v543
    %856 = vmatprep.subr.mxu0 %v550
    %857 = vmatpush1.msra.mxu0 %v549
    %858 = vmatprep.subr.mxu0 %v556
    %859 = vmatpush1.msra.mxu0 %v555
    %860 = vmatprep.subr.mxu0 %v562
    %861 = vmatpush1.msra.mxu0 %v561
    %862 = vmatprep.subr.mxu0 %v568
    %863 = vmatpush1.msra.mxu0 %v567
    %864 = vmatprep.subr.mxu0 %v574
    %865 = vmatpush1.msra.mxu0 %v573
    %866 = vmatprep.subr.mxu0 %v580
    %867 = vmatpush1.msra.mxu0 %v579
    %868 = vmatprep.subr.mxu0 %v586
    %869 = vmatpush1.msra.mxu0 %v585
    %870 = vmatprep.subr.mxu0 %v592
    %871 = vmatpush1.msra.mxu0 %v591
    %872 = vmatprep.subr.mxu0 %v598
    %873 = vmatpush1.msra.mxu0 %v597
    %874 = vmatprep.subr.mxu0 %v604
    %875 = vmatpush1.msra.mxu0 %v603
    %876 = vmatprep.subr.mxu0 %v610
    %877 = vmatpush1.msra.mxu0 %v609
    %878 = vmatprep.subr.mxu0 %v616
    %879 = vmatpush1.msra.mxu0 %v615
    %880 = vmatprep.subr.mxu0 %v622
    %881 = vmatpush1.msra.mxu0 %v621
    %882 = vmatprep.subr.mxu0 %v628
    %883 = vmatpush1.msra.mxu0 %v627
    %884 = vmatprep.subr.mxu0 %v634
    %885 = vmatpush1.msra.mxu0 %v633
    %886 = vmatprep.subr.mxu0 %v640
    %887 = vmatpush1.msra.mxu0 %v639
    %888 = vmatprep.subr.mxu0 %v646
    %889 = vmatpush1.msra.mxu0 %v645
    %890 = vmatprep.mubr.f32.mxu0 %v677
    %891 = vmatmul.mubr.f32.gmra.mrb[0].mxu0 %v676
    %v892 = vpop.f32.mrb[0].mxu0
    %v893 = vadd.f32 %v822, %v892
    %v894 = vpop.f32.mrb[0].mxu0
    %v895 = vadd.f32 %v824, %v894
    %896 = vdwg.mxu0
    %897 = vmatprep.subr.mxu0 %v78
    %898 = vmatpush1.msra.mxu0 %v77
    %899 = vmatprep.subr.mxu0 %v84
    %900 = vmatpush1.msra.mxu0 %v83
    %901 = vmatprep.subr.mxu0 %v90
    %902 = vmatpush1.msra.mxu0 %v89
    %903 = vmatprep.subr.mxu0 %v96
    %904 = vmatpush1.msra.mxu0 %v95
    %905 = vmatprep.subr.mxu0 %v102
    %906 = vmatpush1.msra.mxu0 %v101
    %907 = vmatprep.subr.mxu0 %v108
    %908 = vmatpush1.msra.mxu0 %v107
    %909 = vmatprep.subr.mxu0 %v114
    %910 = vmatpush1.msra.mxu0 %v113
    %911 = vmatprep.subr.mxu0 %v120
    %912 = vmatpush1.msra.mxu0 %v119
    %913 = vmatprep.subr.mxu0 %v126
    %914 = vmatpush1.msra.mxu0 %v125
    %915 = vmatprep.subr.mxu0 %v132
    %916 = vmatpush1.msra.mxu0 %v131
    %917 = vmatprep.subr.mxu0 %v138
    %918 = vmatpush1.msra.mxu0 %v137
    %919 = vmatprep.subr.mxu0 %v144
    %920 = vmatpush1.msra.mxu0 %v143
    %921 = vmatprep.subr.mxu0 %v150
    %922 = vmatpush1.msra.mxu0 %v149
    %923 = vmatprep.subr.mxu0 %v156
    %924 = vmatpush1.msra.mxu0 %v155
    %925 = vmatprep.subr.mxu0 %v162
    %926 = vmatpush1.msra.mxu0 %v161
    %927 = vmatprep.subr.mxu0 %v168
    %928 = vmatpush1.msra.mxu0 %v167
    %929 = vmatprep.subr.mxu0 %v174
    %930 = vmatpush1.msra.mxu0 %v173
    %931 = vmatprep.subr.mxu0 %v180
    %932 = vmatpush1.msra.mxu0 %v179
    %933 = vmatprep.subr.mxu0 %v186
    %934 = vmatpush1.msra.mxu0 %v185
    %935 = vmatprep.subr.mxu0 %v192
    %936 = vmatpush1.msra.mxu0 %v191
    %937 = vmatprep.subr.mxu0 %v198
    %938 = vmatpush1.msra.mxu0 %v197
    %939 = vmatprep.subr.mxu0 %v204
    %940 = vmatpush1.msra.mxu0 %v203
    %941 = vmatprep.subr.mxu0 %v210
    %942 = vmatpush1.msra.mxu0 %v209
    %943 = vmatprep.subr.mxu0 %v216
    %944 = vmatpush1.msra.mxu0 %v215
    %945 = vmatprep.subr.mxu0 %v222
    %946 = vmatpush1.msra.mxu0 %v221
    %947 = vmatprep.subr.mxu0 %v228
    %948 = vmatpush1.msra.mxu0 %v227
    %949 = vmatprep.subr.mxu0 %v234
    %950 = vmatpush1.msra.mxu0 %v233
    %951 = vmatprep.subr.mxu0 %v240
    %952 = vmatpush1.msra.mxu0 %v239
    %953 = vmatprep.subr.mxu0 %v246
    %954 = vmatpush1.msra.mxu0 %v245
    %955 = vmatprep.subr.mxu0 %v252
    %956 = vmatpush1.msra.mxu0 %v251
    %957 = vmatprep.subr.mxu0 %v258
    %958 = vmatpush1.msra.mxu0 %v257
    %959 = vmatprep.subr.mxu0 %v264
    %960 = vmatpush1.msra.mxu0 %v263
    %961 = vmatprep.mubr.f32.mxu0 %v668
    %962 = vmatmul.mubr.f32.gmra.mrb[0].mxu0 %v660
    %v963 = vpop.f32.mrb[0].mxu0
    %v964 = vadd.f32 0.0, %v963
    %v965 = vpop.f32.mrb[0].mxu0
    %v966 = vadd.f32 0.0, %v965
    %967 = vdwg.mxu0
    %968 = vmatprep.subr.mxu0 %v270
    %969 = vmatpush1.msra.mxu0 %v269
    %970 = vmatprep.subr.mxu0 %v276
    %971 = vmatpush1.msra.mxu0 %v275
    %972 = vmatprep.subr.mxu0 %v282
    %973 = vmatpush1.msra.mxu0 %v281
    %974 = vmatprep.subr.mxu0 %v288
    %975 = vmatpush1.msra.mxu0 %v287
    %976 = vmatprep.subr.mxu0 %v294
    %977 = vmatpush1.msra.mxu0 %v293
    %978 = vmatprep.subr.mxu0 %v300
    %979 = vmatpush1.msra.mxu0 %v299
    %980 = vmatprep.subr.mxu0 %v306
    %981 = vmatpush1.msra.mxu0 %v305
    %982 = vmatprep.subr.mxu0 %v312
    %983 = vmatpush1.msra.mxu0 %v311
    %984 = vmatprep.subr.mxu0 %v318
    %985 = vmatpush1.msra.mxu0 %v317
    %986 = vmatprep.subr.mxu0 %v324
    %987 = vmatpush1.msra.mxu0 %v323
    %988 = vmatprep.subr.mxu0 %v330
    %989 = vmatpush1.msra.mxu0 %v329
    %990 = vmatprep.subr.mxu0 %v336
    %991 = vmatpush1.msra.mxu0 %v335
    %992 = vmatprep.subr.mxu0 %v342
    %993 = vmatpush1.msra.mxu0 %v341
    %994 = vmatprep.subr.mxu0 %v348
    %995 = vmatpush1.msra.mxu0 %v347
    %996 = vmatprep.subr.mxu0 %v354
    %997 = vmatpush1.msra.mxu0 %v353
    %998 = vmatprep.subr.mxu0 %v360
    %999 = vmatpush1.msra.mxu0 %v359
    %1000 = vmatprep.subr.mxu0 %v366
    %1001 = vmatpush1.msra.mxu0 %v365
    %1002 = vmatprep.subr.mxu0 %v372
    %1003 = vmatpush1.msra.mxu0 %v371
    %1004 = vmatprep.subr.mxu0 %v378
    %1005 = vmatpush1.msra.mxu0 %v377
    %1006 = vmatprep.subr.mxu0 %v384
    %1007 = vmatpush1.msra.mxu0 %v383
    %1008 = vmatprep.subr.mxu0 %v390
    %1009 = vmatpush1.msra.mxu0 %v389
    %1010 = vmatprep.subr.mxu0 %v396
    %1011 = vmatpush1.msra.mxu0 %v395
    %1012 = vmatprep.subr.mxu0 %v402
    %1013 = vmatpush1.msra.mxu0 %v401
    %1014 = vmatprep.subr.mxu0 %v408
    %1015 = vmatpush1.msra.mxu0 %v407
    %1016 = vmatprep.subr.mxu0 %v414
    %1017 = vmatpush1.msra.mxu0 %v413
    %1018 = vmatprep.subr.mxu0 %v420
    %1019 = vmatpush1.msra.mxu0 %v419
    %1020 = vmatprep.subr.mxu0 %v426
    %1021 = vmatpush1.msra.mxu0 %v425
    %1022 = vmatprep.subr.mxu0 %v432
    %1023 = vmatpush1.msra.mxu0 %v431
    %1024 = vmatprep.subr.mxu0 %v438
    %1025 = vmatpush1.msra.mxu0 %v437
    %1026 = vmatprep.subr.mxu0 %v444
    %1027 = vmatpush1.msra.mxu0 %v443
    %1028 = vmatprep.subr.mxu0 %v450
    %1029 = vmatpush1.msra.mxu0 %v449
    %1030 = vmatprep.subr.mxu0 %v456
    %1031 = vmatpush1.msra.mxu0 %v455
    %1032 = vmatprep.mubr.f32.mxu0 %v669
    %1033 = vmatmul.mubr.f32.gmra.mrb[0].mxu0 %v667
    %v1034 = vpop.f32.mrb[0].mxu0
    %v1035 = vadd.f32 %v964, %v1034
    %v1036 = vpop.f32.mrb[0].mxu0
    %v1037 = vadd.f32 %v966, %v1036
    %1038 = vdwg.mxu0
    %1039 = vmatprep.subr.mxu0 %v462
    %1040 = vmatpush1.msra.mxu0 %v461
    %1041 = vmatprep.subr.mxu0 %v468
    %1042 = vmatpush1.msra.mxu0 %v467
    %1043 = vmatprep.subr.mxu0 %v474
    %1044 = vmatpush1.msra.mxu0 %v473
    %1045 = vmatprep.subr.mxu0 %v480
    %1046 = vmatpush1.msra.mxu0 %v479
    %1047 = vmatprep.subr.mxu0 %v486
    %1048 = vmatpush1.msra.mxu0 %v485
    %1049 = vmatprep.subr.mxu0 %v492
    %1050 = vmatpush1.msra.mxu0 %v491
    %1051 = vmatprep.subr.mxu0 %v498
    %1052 = vmatpush1.msra.mxu0 %v497
    %1053 = vmatprep.subr.mxu0 %v504
    %1054 = vmatpush1.msra.mxu0 %v503
    %1055 = vmatprep.subr.mxu0 %v510
    %1056 = vmatpush1.msra.mxu0 %v509
    %1057 = vmatprep.subr.mxu0 %v516
    %1058 = vmatpush1.msra.mxu0 %v515
    %1059 = vmatprep.subr.mxu0 %v522
    %1060 = vmatpush1.msra.mxu0 %v521
    %1061 = vmatprep.subr.mxu0 %v528
    %1062 = vmatpush1.msra.mxu0 %v527
    %1063 = vmatprep.subr.mxu0 %v534
    %1064 = vmatpush1.msra.mxu0 %v533
    %1065 = vmatprep.subr.mxu0 %v540
    %1066 = vmatpush1.msra.mxu0 %v539
    %1067 = vmatprep.subr.mxu0 %v546
    %1068 = vmatpush1.msra.mxu0 %v545
    %1069 = vmatprep.subr.mxu0 %v552
    %1070 = vmatpush1.msra.mxu0 %v551
    %1071 = vmatprep.subr.mxu0 %v558
    %1072 = vmatpush1.msra.mxu0 %v557
    %1073 = vmatprep.subr.mxu0 %v564
    %1074 = vmatpush1.msra.mxu0 %v563
    %1075 = vmatprep.subr.mxu0 %v570
    %1076 = vmatpush1.msra.mxu0 %v569
    %1077 = vmatprep.subr.mxu0 %v576
    %1078 = vmatpush1.msra.mxu0 %v575
    %1079 = vmatprep.subr.mxu0 %v582
    %1080 = vmatpush1.msra.mxu0 %v581
    %1081 = vmatprep.subr.mxu0 %v588
    %1082 = vmatpush1.msra.mxu0 %v587
    %1083 = vmatprep.subr.mxu0 %v594
    %1084 = vmatpush1.msra.mxu0 %v593
    %1085 = vmatprep.subr.mxu0 %v600
    %1086 = vmatpush1.msra.mxu0 %v599
    %1087 = vmatprep.subr.mxu0 %v606
    %1088 = vmatpush1.msra.mxu0 %v605
    %1089 = vmatprep.subr.mxu0 %v612
    %1090 = vmatpush1.msra.mxu0 %v611
    %1091 = vmatprep.subr.mxu0 %v618
    %1092 = vmatpush1.msra.mxu0 %v617
    %1093 = vmatprep.subr.mxu0 %v624
    %1094 = vmatpush1.msra.mxu0 %v623
    %1095 = vmatprep.subr.mxu0 %v630
    %1096 = vmatpush1.msra.mxu0 %v629
    %1097 = vmatprep.subr.mxu0 %v636
    %1098 = vmatpush1.msra.mxu0 %v635
    %1099 = vmatprep.subr.mxu0 %v642
    %1100 = vmatpush1.msra.mxu0 %v641
    %1101 = vmatprep.subr.mxu0 %v648
    %1102 = vmatpush1.msra.mxu0 %v647
    %1103 = vmatprep.mubr.f32.mxu0 %v677
    %1104 = vmatmul.mubr.f32.gmra.mrb[0].mxu0 %v676
    %v1105 = vpop.f32.mrb[0].mxu0
    %v1106 = vadd.f32 %v1035, %v1105
    %v1107 = vpop.f32.mrb[0].mxu0
    %v1108 = vadd.f32 %v1037, %v1107
    %1109 = vdwg.mxu0
    %1110 = vmatprep.subr.mxu0 %v80
    %1111 = vmatpush1.msra.mxu0 %v79
    %1112 = vmatprep.subr.mxu0 %v86
    %1113 = vmatpush1.msra.mxu0 %v85
    %1114 = vmatprep.subr.mxu0 %v92
    %1115 = vmatpush1.msra.mxu0 %v91
    %1116 = vmatprep.subr.mxu0 %v98
    %1117 = vmatpush1.msra.mxu0 %v97
    %1118 = vmatprep.subr.mxu0 %v104
    %1119 = vmatpush1.msra.mxu0 %v103
    %1120 = vmatprep.subr.mxu0 %v110
    %1121 = vmatpush1.msra.mxu0 %v109
    %1122 = vmatprep.subr.mxu0 %v116
    %1123 = vmatpush1.msra.mxu0 %v115
    %1124 = vmatprep.subr.mxu0 %v122
    %1125 = vmatpush1.msra.mxu0 %v121
    %1126 = vmatprep.subr.mxu0 %v128
    %1127 = vmatpush1.msra.mxu0 %v127
    %1128 = vmatprep.subr.mxu0 %v134
    %1129 = vmatpush1.msra.mxu0 %v133
    %1130 = vmatprep.subr.mxu0 %v140
    %1131 = vmatpush1.msra.mxu0 %v139
    %1132 = vmatprep.subr.mxu0 %v146
    %1133 = vmatpush1.msra.mxu0 %v145
    %1134 = vmatprep.subr.mxu0 %v152
    %1135 = vmatpush1.msra.mxu0 %v151
    %1136 = vmatprep.subr.mxu0 %v158
    %1137 = vmatpush1.msra.mxu0 %v157
    %1138 = vmatprep.subr.mxu0 %v164
    %1139 = vmatpush1.msra.mxu0 %v163
    %1140 = vmatprep.subr.mxu0 %v170
    %1141 = vmatpush1.msra.mxu0 %v169
    %1142 = vmatprep.subr.mxu0 %v176
    %1143 = vmatpush1.msra.mxu0 %v175
    %1144 = vmatprep.subr.mxu0 %v182
    %1145 = vmatpush1.msra.mxu0 %v181
    %1146 = vmatprep.subr.mxu0 %v188
    %1147 = vmatpush1.msra.mxu0 %v187
    %1148 = vmatprep.subr.mxu0 %v194
    %1149 = vmatpush1.msra.mxu0 %v193
    %1150 = vmatprep.subr.mxu0 %v200
    %1151 = vmatpush1.msra.mxu0 %v199
    %1152 = vmatprep.subr.mxu0 %v206
    %1153 = vmatpush1.msra.mxu0 %v205
    %1154 = vmatprep.subr.mxu0 %v212
    %1155 = vmatpush1.msra.mxu0 %v211
    %1156 = vmatprep.subr.mxu0 %v218
    %1157 = vmatpush1.msra.mxu0 %v217
    %1158 = vmatprep.subr.mxu0 %v224
    %1159 = vmatpush1.msra.mxu0 %v223
    %1160 = vmatprep.subr.mxu0 %v230
    %1161 = vmatpush1.msra.mxu0 %v229
    %1162 = vmatprep.subr.mxu0 %v236
    %1163 = vmatpush1.msra.mxu0 %v235
    %1164 = vmatprep.subr.mxu0 %v242
    %1165 = vmatpush1.msra.mxu0 %v241
    %1166 = vmatprep.subr.mxu0 %v248
    %1167 = vmatpush1.msra.mxu0 %v247
    %1168 = vmatprep.subr.mxu0 %v254
    %1169 = vmatpush1.msra.mxu0 %v253
    %1170 = vmatprep.subr.mxu0 %v260
    %1171 = vmatpush1.msra.mxu0 %v259
    %1172 = vmatprep.subr.mxu0 %v266
    %1173 = vmatpush1.msra.mxu0 %v265
    %1174 = vmatprep.mubr.f32.mxu0 %v668
    %1175 = vmatmul.mubr.f32.gmra.mrb[0].mxu0 %v660
    %v1176 = vpop.f32.mrb[0].mxu0
    %v1177 = vadd.f32 0.0, %v1176
    %v1178 = vpop.f32.mrb[0].mxu0
    %v1179 = vadd.f32 0.0, %v1178
    %1180 = vdwg.mxu0
    %1181 = vmatprep.subr.mxu0 %v272
    %1182 = vmatpush1.msra.mxu0 %v271
    %1183 = vmatprep.subr.mxu0 %v278
    %1184 = vmatpush1.msra.mxu0 %v277
    %1185 = vmatprep.subr.mxu0 %v284
    %1186 = vmatpush1.msra.mxu0 %v283
    %1187 = vmatprep.subr.mxu0 %v290
    %1188 = vmatpush1.msra.mxu0 %v289
    %1189 = vmatprep.subr.mxu0 %v296
    %1190 = vmatpush1.msra.mxu0 %v295
    %1191 = vmatprep.subr.mxu0 %v302
    %1192 = vmatpush1.msra.mxu0 %v301
    %1193 = vmatprep.subr.mxu0 %v308
    %1194 = vmatpush1.msra.mxu0 %v307
    %1195 = vmatprep.subr.mxu0 %v314
    %1196 = vmatpush1.msra.mxu0 %v313
    %1197 = vmatprep.subr.mxu0 %v320
    %1198 = vmatpush1.msra.mxu0 %v319
    %1199 = vmatprep.subr.mxu0 %v326
    %1200 = vmatpush1.msra.mxu0 %v325
    %1201 = vmatprep.subr.mxu0 %v332
    %1202 = vmatpush1.msra.mxu0 %v331
    %1203 = vmatprep.subr.mxu0 %v338
    %1204 = vmatpush1.msra.mxu0 %v337
    %1205 = vmatprep.subr.mxu0 %v344
    %1206 = vmatpush1.msra.mxu0 %v343
    %1207 = vmatprep.subr.mxu0 %v350
    %1208 = vmatpush1.msra.mxu0 %v349
    %1209 = vmatprep.subr.mxu0 %v356
    %1210 = vmatpush1.msra.mxu0 %v355
    %1211 = vmatprep.subr.mxu0 %v362
    %1212 = vmatpush1.msra.mxu0 %v361
    %1213 = vmatprep.subr.mxu0 %v368
    %1214 = vmatpush1.msra.mxu0 %v367
    %1215 = vmatprep.subr.mxu0 %v374
    %1216 = vmatpush1.msra.mxu0 %v373
    %1217 = vmatprep.subr.mxu0 %v380
    %1218 = vmatpush1.msra.mxu0 %v379
    %1219 = vmatprep.subr.mxu0 %v386
    %1220 = vmatpush1.msra.mxu0 %v385
    %1221 = vmatprep.subr.mxu0 %v392
    %1222 = vmatpush1.msra.mxu0 %v391
    %1223 = vmatprep.subr.mxu0 %v398
    %1224 = vmatpush1.msra.mxu0 %v397
    %1225 = vmatprep.subr.mxu0 %v404
    %1226 = vmatpush1.msra.mxu0 %v403
    %1227 = vmatprep.subr.mxu0 %v410
    %1228 = vmatpush1.msra.mxu0 %v409
    %1229 = vmatprep.subr.mxu0 %v416
    %1230 = vmatpush1.msra.mxu0 %v415
    %1231 = vmatprep.subr.mxu0 %v422
    %1232 = vmatpush1.msra.mxu0 %v421
    %1233 = vmatprep.subr.mxu0 %v428
    %1234 = vmatpush1.msra.mxu0 %v427
    %1235 = vmatprep.subr.mxu0 %v434
    %1236 = vmatpush1.msra.mxu0 %v433
    %1237 = vmatprep.subr.mxu0 %v440
    %1238 = vmatpush1.msra.mxu0 %v439
    %1239 = vmatprep.subr.mxu0 %v446
    %1240 = vmatpush1.msra.mxu0 %v445
    %1241 = vmatprep.subr.mxu0 %v452
    %1242 = vmatpush1.msra.mxu0 %v451
    %1243 = vmatprep.subr.mxu0 %v458
    %1244 = vmatpush1.msra.mxu0 %v457
    %1245 = vmatprep.mubr.f32.mxu0 %v669
    %1246 = vmatmul.mubr.f32.gmra.mrb[0].mxu0 %v667
    %v1247 = vpop.f32.mrb[0].mxu0
    %v1248 = vadd.f32 %v1177, %v1247
    %v1249 = vpop.f32.mrb[0].mxu0
    %v1250 = vadd.f32 %v1179, %v1249
    %1251 = vdwg.mxu0
    %1252 = vmatprep.subr.mxu0 %v464
    %1253 = vmatpush1.msra.mxu0 %v463
    %1254 = vmatprep.subr.mxu0 %v470
    %1255 = vmatpush1.msra.mxu0 %v469
    %1256 = vmatprep.subr.mxu0 %v476
    %1257 = vmatpush1.msra.mxu0 %v475
    %1258 = vmatprep.subr.mxu0 %v482
    %1259 = vmatpush1.msra.mxu0 %v481
    %1260 = vmatprep.subr.mxu0 %v488
    %1261 = vmatpush1.msra.mxu0 %v487
    %1262 = vmatprep.subr.mxu0 %v494
    %1263 = vmatpush1.msra.mxu0 %v493
    %1264 = vmatprep.subr.mxu0 %v500
    %1265 = vmatpush1.msra.mxu0 %v499
    %1266 = vmatprep.subr.mxu0 %v506
    %1267 = vmatpush1.msra.mxu0 %v505
    %1268 = vmatprep.subr.mxu0 %v512
    %1269 = vmatpush1.msra.mxu0 %v511
    %1270 = vmatprep.subr.mxu0 %v518
    %1271 = vmatpush1.msra.mxu0 %v517
    %1272 = vmatprep.subr.mxu0 %v524
    %1273 = vmatpush1.msra.mxu0 %v523
    %1274 = vmatprep.subr.mxu0 %v530
    %1275 = vmatpush1.msra.mxu0 %v529
    %1276 = vmatprep.subr.mxu0 %v536
    %1277 = vmatpush1.msra.mxu0 %v535
    %1278 = vmatprep.subr.mxu0 %v542
    %1279 = vmatpush1.msra.mxu0 %v541
    %1280 = vmatprep.subr.mxu0 %v548
    %1281 = vmatpush1.msra.mxu0 %v547
    %1282 = vmatprep.subr.mxu0 %v554
    %1283 = vmatpush1.msra.mxu0 %v553
    %1284 = vmatprep.subr.mxu0 %v560
    %1285 = vmatpush1.msra.mxu0 %v559
    %1286 = vmatprep.subr.mxu0 %v566
    %1287 = vmatpush1.msra.mxu0 %v565
    %1288 = vmatprep.subr.mxu0 %v572
    %1289 = vmatpush1.msra.mxu0 %v571
    %1290 = vmatprep.subr.mxu0 %v578
    %1291 = vmatpush1.msra.mxu0 %v577
    %1292 = vmatprep.subr.mxu0 %v584
    %1293 = vmatpush1.msra.mxu0 %v583
    %1294 = vmatprep.subr.mxu0 %v590
    %1295 = vmatpush1.msra.mxu0 %v589
    %1296 = vmatprep.subr.mxu0 %v596
    %1297 = vmatpush1.msra.mxu0 %v595
    %1298 = vmatprep.subr.mxu0 %v602
    %1299 = vmatpush1.msra.mxu0 %v601
    %1300 = vmatprep.subr.mxu0 %v608
    %1301 = vmatpush1.msra.mxu0 %v607
    %1302 = vmatprep.subr.mxu0 %v614
    %1303 = vmatpush1.msra.mxu0 %v613
    %1304 = vmatprep.subr.mxu0 %v620
    %1305 = vmatpush1.msra.mxu0 %v619
    %1306 = vmatprep.subr.mxu0 %v626
    %1307 = vmatpush1.msra.mxu0 %v625
    %1308 = vmatprep.subr.mxu0 %v632
    %1309 = vmatpush1.msra.mxu0 %v631
    %1310 = vmatprep.subr.mxu0 %v638
    %1311 = vmatpush1.msra.mxu0 %v637
    %1312 = vmatprep.subr.mxu0 %v644
    %1313 = vmatpush1.msra.mxu0 %v643
    %1314 = vmatprep.subr.mxu0 %v650
    %1315 = vmatpush1.msra.mxu0 %v649
    %1316 = vmatprep.mubr.f32.mxu0 %v677
    %1317 = vmatmul.mubr.f32.gmra.mrb[0].mxu0 %v676
    %v1318 = vpop.f32.mrb[0].mxu0
    %v1319 = vadd.f32 %v1248, %v1318
    %v1320 = vpop.f32.mrb[0].mxu0
    %v1321 = vadd.f32 %v1250, %v1320
    %1322 = vdwg.mxu0
    %v1323 = vld [vmem:[%s1] sm:$0x3]
    %vm1324 = vcmp.gt.f32.partialorder %v1323, 0.0
    %v1325 = vld [vmem:[%s2] sm:$0x3]
    %vm1326 = vcmp.gt.f32.partialorder %v1325, 0.0
    %v1327 = vsel %vm1324, 1, 0
    %1328 = vset.pattern.permute.xlu0 0
    %1329 = vperm.xlu0 %1328, %v1327
    %v1330 = vpop.permute.xlu0 %1329
    %vm1331 = vcmp.eq.s32.totalorder %v1330, 1
    %v1332 = vsel %vm1331, %v893, %v660
    %v1333 = vsel %vm1331, %v895, %v668
    %v1334 = vsel %vm1331, %v1106, %v667
    %v1335 = vsel %vm1331, %v1108, %v669
    %v1336 = vsel %vm1331, %v1319, %v676
    %v1337 = vsel %vm1331, %v1321, %v677
    %v1338 = vld [vmem:[#allocation7] sm:$0x3f]
    %v1340 = vlaneseq
    %v1341 = vshrl.u32 %v1340, 7
    %v1342 = vsub.s32 0, %v1341
    %v1343 = vrot.slane %v1338, %v1342
    %v1344 = vlaneseq
    %v1345 = vshrl.u32 %v1344, 7
    %v1346 = vsub.s32 1, %v1345
    %v1347 = vrot.slane %v1338, %v1346
    %v1348 = vlaneseq
    %v1349 = vshrl.u32 %v1348, 7
    %v1350 = vsub.s32 2, %v1349
    %v1351 = vrot.slane %v1338, %v1350
    %v1352 = vlaneseq
    %v1353 = vshrl.u32 %v1352, 7
    %v1354 = vsub.s32 3, %v1353
    %v1355 = vrot.slane %v1338, %v1354
    %v1356 = vlaneseq
    %v1357 = vshrl.u32 %v1356, 7
    %v1358 = vsub.s32 4, %v1357
    %v1359 = vrot.slane %v1338, %v1358
    %v1360 = vlaneseq
    %v1361 = vshrl.u32 %v1360, 7
    %v1362 = vsub.s32 5, %v1361
    %v1363 = vrot.slane %v1338, %v1362
    %v1370 = vsub.f32 %v1332, %v1343
    %v1371 = vsub.f32 %v1333, %v1347
    %v1372 = vsub.f32 %v1334, %v1351
    %v1373 = vsub.f32 %v1335, %v1355
    %v1374 = vsub.f32 %v1336, %v1359
    %v1375 = vsub.f32 %v1337, %v1363
    %v1376 = vld [vmem:[#allocation8] sm:$0x3f]
    %v1378 = vlaneseq
    %v1379 = vshrl.u32 %v1378, 7
    %v1380 = vsub.s32 0, %v1379
    %v1381 = vrot.slane %v1376, %v1380
    %v1382 = vlaneseq
    %v1383 = vshrl.u32 %v1382, 7
    %v1384 = vsub.s32 1, %v1383
    %v1385 = vrot.slane %v1376, %v1384
    %v1386 = vlaneseq
    %v1387 = vshrl.u32 %v1386, 7
    %v1388 = vsub.s32 2, %v1387
    %v1389 = vrot.slane %v1376, %v1388
    %v1390 = vlaneseq
    %v1391 = vshrl.u32 %v1390, 7
    %v1392 = vsub.s32 3, %v1391
    %v1393 = vrot.slane %v1376, %v1392
    %v1394 = vlaneseq
    %v1395 = vshrl.u32 %v1394, 7
    %v1396 = vsub.s32 4, %v1395
    %v1397 = vrot.slane %v1376, %v1396
    %v1398 = vlaneseq
    %v1399 = vshrl.u32 %v1398, 7
    %v1400 = vsub.s32 5, %v1399
    %v1401 = vrot.slane %v1376, %v1400
    %v1408 = vmul.f32 %v1370, %v1381
    %v1409 = vmul.f32 %v1371, %v1385
    %v1410 = vmul.f32 %v1372, %v1389
    %v1411 = vmul.f32 %v1373, %v1393
    %v1412 = vmul.f32 %v1374, %v1397
    %v1413 = vmul.f32 %v1375, %v1401
    %v1414 = vsel %vm1326, 1, 0
    %1415 = vset.pattern.permute.xlu0 0
    %1416 = vperm.xlu0 %1415, %v1414
    %v1417 = vpop.permute.xlu0 %1416
    %vm1418 = vcmp.eq.s32.totalorder %v1417, 1
    %v1419 = vsel %vm1418, %v1408, %v1332
    %v1420 = vsel %vm1418, %v1409, %v1333
    %v1421 = vsel %vm1418, %v1410, %v1334
    %v1422 = vsel %vm1418, %v1411, %v1335
    %v1423 = vsel %vm1418, %v1412, %v1336
    %v1424 = vsel %vm1418, %v1413, %v1337
    %v1431 = vcombine.low %v1419, %v1420
    %v1432 = vcombine.low %v1421, %v1422
    %v1434 = vunpack.c.l.s4 1983009808
    %v1435 = vunpack.c.0.s8 %v1434
    %v1436 = vlaneseq
    %v1437 = vshrl.u32 %v1436, 7
    %v1438 = vsub.s32 %v1435, %v1437
    %v1439 = vrot.slane %v1431, %v1438
    %v1441 = vunpack.c.l.s4 1983009808
    %v1442 = vunpack.c.0.s8 %v1441
    %v1443 = vlaneseq
    %v1444 = vshrl.u32 %v1443, 7
    %v1445 = vsub.s32 %v1442, %v1444
    %v1446 = vrot.slane %v1432, %v1445
    %v1447 = vcombine.low %v1439, %v1446
    %v1448 = vcombine.low %v1423, %v1424
    %v1450 = vunpack.c.l.s4 1983009808
    %v1451 = vunpack.c.0.s8 %v1450
    %v1452 = vlaneseq
    %v1453 = vshrl.u32 %v1452, 7
    %v1454 = vsub.s32 %v1451, %v1453
    %v1455 = vrot.slane %v1448, %v1454
    %1458 = vst [vmem:[#allocation10] sm:$0xff] %v1447
    %1459 = vst [vmem:[#allocation10 + $0x8] sm:$0xf] %v1455
    // Predicated region
    $region42: #{tpu_custom_call.1} parent=1 // pred_check
      _
    $region43: #{tpu_custom_call.1} parent=1 // pred_check_branch
      %1461 = sbr.rel (0) target = $region45
    $region44: #{tpu_custom_call.1} parent=1 // pred_region
      %s1463 = ssub.s32 192, 192
      %1464 = vsyncadd [#allocation4], %s1463
      %s1466 = sshll.u32 [#allocation10], 4
      %s1467 = int_to_ptr.vmem [resolvable:$true] %s1466
      %1469 = dma.vmem_to_hbm [thread:$0]  %s1467, 192, %s6, [#allocation4]
    $region45: #{tpu_custom_call.1} parent=1 // pred_fallthru
      _
    // Predicated region
    $region46: #{tpu_custom_call.1} parent=1 // pred_check
      _
    $region47: #{tpu_custom_call.1} parent=1 // pred_check_branch
      %1471 = sbr.rel (0) target = $region49
    $region48: #{tpu_custom_call.1} parent=1 // pred_region
      %1472 = dma.done [#allocation4], 192
    $region49: #{tpu_custom_call.1} parent=1 // pred_fallthru
      _
    %1473 = vsyncpa [#allocation3], 1
    %1474 = vsyncpa [#allocation6], 1
    %1475 = vsyncpa [#allocation9], 1
    %1476 = vsyncpa [#allocation4], 1

</llo_original>
